<compile_context>
chip_gen: v7x
topology: tpu7x:2x2x1
jax: 0.10.0
libtpu: 0.0.40
codegen_flags: <defaults>
</compile_context>

<pallas_src>
import math
import numpy as np
import jax
import jax.numpy as jnp
from jax.experimental import pallas as pl
from jax.experimental.pallas import tpu as pltpu

# ---------------- configuration (small synthetic shapes) ----------------
N = 2                      # batch
C_IN = 3                   # color / depth channels
H = W = 64                 # input spatial
PATCH = 16                 # trunk stub downsample factor
HF = H // PATCH            # feature spatial
WF = W // PATCH
C_TRUNK = 64               # per-trunk feature channels (densenet121 would give 1024)
C_CAT = 2 * C_TRUNK        # per-head concatenated channels (module: 2048)
C_ALL = 2 * C_CAT          # combined [push | grasp] channels
C_HID = 64                 # head hidden channels (matches module)
NUM_ROTATIONS = 16
BN_EPS = 1e-5
KDIM = C_IN * PATCH * PATCH  # 768 patch-embed contraction dim


# ---------------- fused Pallas kernel: merged trunks + both heads ----------------
def _fused_trunk_head_kernel(pc_ref, pd_ref, wc_ref, wd_ref, w0_ref, w1_ref, vec_ref,
                             o_ref, interm_ref):
    # All four trunk patch-embeds in one pass (bf16 MXU operands, f32 accumulation).
    # Weight columns are pre-placed so f is already in the module's channel order
    # [push_color(64)|push_depth(64)|grasp_color(64)|grasp_depth(64)] -> lane-dense 256.
    f = (jnp.dot(pc_ref[...], wc_ref[...], preferred_element_type=jnp.float32)
         + jnp.dot(pd_ref[...], wd_ref[...], preferred_element_type=jnp.float32))
    # Single lane-dense bf16 writeback of the intermediate trunk features.
    interm_ref[...] = f.astype(jnp.bfloat16)

    # Packed broadcast vectors: row 0 = BN0 scale, row 1 = BN0 shift,
    # row 2[:128] = BN1 shift (folded conv0 bias).
    vec = vec_ref[...]
    s0 = vec[0:1, :]
    t0 = vec[1:2, :]
    b1 = vec[2:3, :C_CAT]

    # BN0 + ReLU in f32 on the VPU (v5e has no bf16 VALU).
    a = jnp.maximum(f * s0 + t0, 0.0)

    # 1x1 conv0 for BOTH heads via a block-diagonal (256,128) weight with BN1 scale
    # folded into its columns, then BN1 shift + ReLU.  h = [h_push(64)|h_grasp(64)].
    h = jnp.dot(a.astype(jnp.bfloat16), w0_ref[...],
                preferred_element_type=jnp.float32) + b1
    h = jnp.maximum(h, 0.0)

    # 1x1 conv1 for both heads: (TP,128)@(128,2) -> col 0 = push, col 1 = grasp.
    o_ref[...] = jnp.dot(h, w1_ref[...], preferred_element_type=jnp.float32)


def _tensorcores_per_device():
    """2 on v7x / megacore-style chips (grid sharding pays off), else 1."""
    try:
        kind = jax.devices()[0].device_kind.lower()
        if any(tag in kind for tag in ("v7", "v4", "v5p")):
            return 2
    except Exception:
        pass
    return 1


def fused_trunk_head(pc, pd, kp):
    """pc, pd: (P, KDIM) bf16 patch matrices.
    Returns (o (P,2) f32, interm (P, 256) bf16 in module channel order)."""
    P, K = pc.shape
    # Single full-height block on 1-TC chips (v5e/v6e): fewer grid steps, full MXU M.
    # 256-row blocks only on 2-TC chips so the parallel axis shards across cores.
    cores = _tensorcores_per_device()
    TP = 256 if (cores >= 2 and P > 256 and P % 256 == 0) else P
    grid = (P // TP,)

    row = lambda i: (i, 0)
    rep = lambda i: (0, 0)

    flops = P * (2 * 2 * K * C_ALL + 2 * C_ALL * C_CAT + 2 * C_CAT * 2)
    bytes_accessed = (2 * P * K * 2            # pc, pd (bf16)
                      + 2 * K * C_ALL * 2      # trunk weights (bf16)
                      + C_ALL * C_CAT * 2      # conv0 block-diag (bf16)
                      + C_CAT * 2 * 4          # conv1 (f32)
                      + 8 * C_ALL * 4          # packed BN vectors (f32)
                      + P * 2 * 4              # o (f32)
                      + P * C_ALL * 2)         # interm (bf16)

    out_shape = (
        jax.ShapeDtypeStruct((P, 2), jnp.float32),
        jax.ShapeDtypeStruct((P, C_ALL), jnp.bfloat16),
    )
    return pl.pallas_call(
        _fused_trunk_head_kernel,
        out_shape=out_shape,
        grid=grid,
        in_specs=[
            pl.BlockSpec((TP, K), row),         # color patches (bf16)
            pl.BlockSpec((TP, K), row),         # depth patches (bf16)
            pl.BlockSpec((K, C_ALL), rep),      # color trunk weights (module order)
            pl.BlockSpec((K, C_ALL), rep),      # depth trunk weights (module order)
            pl.BlockSpec((C_ALL, C_CAT), rep),  # conv0 block-diag (BN1 folded)
            pl.BlockSpec((C_CAT, 2), rep),      # conv1 (push | grasp)
            pl.BlockSpec((8, C_ALL), rep),      # packed BN0 scale/shift + BN1 shift
        ],
        out_specs=(
            pl.BlockSpec((TP, 2), row),
            pl.BlockSpec((TP, C_ALL), row),
        ),
        compiler_params=pltpu.CompilerParams(
            dimension_semantics=("parallel",)),
        cost_estimate=pl.CostEstimate(
            flops=int(flops), transcendentals=0,
            bytes_accessed=int(bytes_accessed)),
    )(pc, pd, kp['wc'], kp['wd'], kp['w0'], kp['w1'], kp['vec'])


# ---------------- plain-JAX glue (rotation / upsample) ----------------
def affine_grid(theta, h, w):
    """F.affine_grid (align_corners=True era). theta: (R, 2, 3) -> (R, h, w, 2)."""
    # TODO(synk): modern torch defaults to align_corners=False; verify against the
    # torch version the original VPG code targeted.
    xs = jnp.linspace(-1.0, 1.0, w)
    ys = jnp.linspace(-1.0, 1.0, h)
    gx, gy = jnp.meshgrid(xs, ys)                               # (h, w)
    base = jnp.stack([gx, gy, jnp.ones_like(gx)], axis=-1)      # (h, w, 3)
    return jnp.einsum('hwk,rik->rhwi', base, theta)             # (R, h, w, 2)


def grid_sample_nearest(x, grid):
    """F.grid_sample(mode='nearest', padding_mode='zeros', align_corners=True).
    x: (B,C,H,W), grid: (B,H,W,2) normalized coords."""
    # TODO(synk): jnp.round is round-half-even; torch rounds exact .5 slightly
    # differently, so boundary pixels of rotated maps can differ by one sample.
    n, c, h, w = x.shape
    gx = (grid[..., 0] + 1.0) * 0.5 * (w - 1)
    gy = (grid[..., 1] + 1.0) * 0.5 * (h - 1)
    ix = jnp.round(gx).astype(jnp.int32)
    iy = jnp.round(gy).astype(jnp.int32)
    valid = (ix >= 0) & (ix < w) & (iy >= 0) & (iy < h)
    ixc = jnp.clip(ix, 0, w - 1)
    iyc = jnp.clip(iy, 0, h - 1)
    flat = x.reshape(n, c, h * w)
    idx = (iyc * w + ixc).reshape(n, 1, h * w)
    idx = jnp.broadcast_to(idx, (n, c, h * w))
    out = jnp.take_along_axis(flat, idx, axis=2).reshape(n, c, h, w)
    return jnp.where(valid.reshape(n, 1, h, w), out, 0.0)


def upsample_bilinear(x, scale):
    """nn.Upsample(scale_factor=scale, mode='bilinear'), align_corners=False."""
    # TODO(synk): older torch nn.Upsample behaved like align_corners=True; verify.
    n, c, h, w = x.shape

    def interp_matrix(size_in, size_out):
        i = jnp.arange(size_out, dtype=jnp.float32)
        src = jnp.clip((i + 0.5) / scale - 0.5, 0.0, size_in - 1.0)
        lo = jnp.floor(src).astype(jnp.int32)
        hi = jnp.minimum(lo + 1, size_in - 1)
        w_hi = src - lo.astype(jnp.float32)
        w_lo = 1.0 - w_hi
        m = jnp.zeros((size_out, size_in), jnp.float32)
        m = m.at[jnp.arange(size_out), lo].add(w_lo)
        m = m.at[jnp.arange(size_out), hi].add(w_hi)
        return m

    my = interp_matrix(h, h * scale)
    mx = interp_matrix(w, w * scale)
    return jnp.einsum('oh,nchw,pw->ncop', my, x, mx)


def extract_patches(x):
    """(B, 3, H, W) -> (B*HF*WF, KDIM) bf16: non-overlapping 16x16 patches as rows.
    The bf16 cast is folded into this pass so no separate cast pass is emitted."""
    b = x.shape[0]
    p = x.reshape(b, C_IN, HF, PATCH, WF, PATCH)
    p = p.transpose(0, 2, 4, 1, 3, 5).reshape(b * HF * WF, KDIM)
    return p.astype(jnp.bfloat16)


# ---------------- parameters ----------------
def make_raw_params(key):
    ks = jax.random.split(key, 8)

    def kaiming(k, shape, fan_in):
        return (jax.random.normal(k, shape, jnp.float32)
                * np.float32(math.sqrt(2.0 / fan_in)))

    # trunk stub weights (4 trunks)
    trunks = {
        'push_color': kaiming(ks[0], (KDIM, C_TRUNK), KDIM),
        'push_depth': kaiming(ks[1], (KDIM, C_TRUNK), KDIM),
        'grasp_color': kaiming(ks[2], (KDIM, C_TRUNK), KDIM),
        'grasp_depth': kaiming(ks[3], (KDIM, C_TRUNK), KDIM),
    }

    def bn(c):  # eval-mode BatchNorm at module init: gamma=1, beta=0, mean=0, var=1
        return dict(gamma=jnp.ones((c,), jnp.float32),
                    beta=jnp.zeros((c,), jnp.float32),
                    mean=jnp.zeros((c,), jnp.float32),
                    var=jnp.ones((c,), jnp.float32))

    def head(k0, k1):
        return dict(bn0=bn(C_CAT),
                    w0=kaiming(k0, (C_CAT, C_HID), C_CAT),   # 1x1 conv, no bias
                    bn1=bn(C_HID),
                    w1=kaiming(k1, (C_HID, 1), C_HID))       # 1x1 conv, no bias

    return dict(trunks=trunks, push=head(ks[4], ks[5]), grasp=head(ks[6], ks[7]))


def _bn_fold(bn):
    s = bn['gamma'] / jnp.sqrt(bn['var'] + BN_EPS)
    t = bn['beta'] - bn['mean'] * s
    return s, t


def prep_kernel_params(p):
    """Fold BN / place trunk & head weights into the fused-kernel layout."""
    t = p['trunks']
    # Trunk weights column-placed so f = pc@wc + pd@wd is directly in the module's
    # channel order [push_color | push_depth | grasp_color | grasp_depth].
    # TODO(synk): at real densenet widths (C_CAT=2048) drop this zero-padded layout
    # (run color/depth halves as separate K-blocked matmuls) and re-derive tiling.
    wc = jnp.zeros((KDIM, C_ALL), jnp.float32)
    wc = wc.at[:, 0:C_TRUNK].set(t['push_color'])
    wc = wc.at[:, 2 * C_TRUNK:3 * C_TRUNK].set(t['grasp_color'])
    wd = jnp.zeros((KDIM, C_ALL), jnp.float32)
    wd = wd.at[:, C_TRUNK:2 * C_TRUNK].set(t['push_depth'])
    wd = wd.at[:, 3 * C_TRUNK:].set(t['grasp_depth'])

    s0p, t0p = _bn_fold(p['push']['bn0'])    # (128,) over [color|depth]
    s0g, t0g = _bn_fold(p['grasp']['bn0'])
    s1p, t1p = _bn_fold(p['push']['bn1'])    # (64,)
    s1g, t1g = _bn_fold(p['grasp']['bn1'])

    s0 = jnp.concatenate([s0p, s0g])         # (256,) BN0 scale, module order
    t0 = jnp.concatenate([t0p, t0g])         # (256,) BN0 shift
    b1 = jnp.concatenate([t1p, t1g])         # (128,) BN1 shift

    # conv0 with BN1 scale folded into its output columns (exact linear fold),
    # block-diagonal so both heads share one lane-dense matmul: h=[h_push|h_grasp].
    w0p = p['push']['w0'] * s1p[None, :]     # (128, 64)
    w0g = p['grasp']['w0'] * s1g[None, :]
    w0 = jnp.zeros((C_ALL, C_CAT), jnp.float32)
    w0 = w0.at[:C_CAT, :C_HID].set(w0p)
    w0 = w0.at[C_CAT:, C_HID:].set(w0g)

    # conv1 for both heads: (128, 2), col 0 = push, col 1 = grasp.
    w1 = jnp.zeros((C_CAT, 2), jnp.float32)
    w1 = w1.at[:C_HID, 0].set(p['push']['w1'][:, 0])
    w1 = w1.at[C_HID:, 1].set(p['grasp']['w1'][:, 0])

    # Pack all broadcast vectors into one (8, 256) f32 input (one DMA, one buffer).
    vec = jnp.zeros((8, C_ALL), jnp.float32)
    vec = vec.at[0].set(s0).at[1].set(t0).at[2, :C_CAT].set(b1)

    return dict(wc=wc.astype(jnp.bfloat16), wd=wd.astype(jnp.bfloat16),
                w0=w0.astype(jnp.bfloat16), w1=w1, vec=vec)


# ---------------- batched forward (all rotations in one shot, jitted) ----------------
@jax.jit
def _forward_batched(color, depth, thetas_b, thetas_a, kparams):
    R = thetas_b.shape[0]
    RN = R * N

    # Rotate inputs forward by -theta for ALL rotations at once.
    grid_b = jnp.repeat(affine_grid(thetas_b, H, W), N, axis=0)     # (R*N, H, W, 2)
    color_rep = jnp.tile(color, (R, 1, 1, 1))                       # (R*N, 3, H, W)
    depth_rep = jnp.tile(depth, (R, 1, 1, 1))
    rot_color = grid_sample_nearest(color_rep, grid_b)
    rot_depth = grid_sample_nearest(depth_rep, grid_b)

    # Patch extraction once per input (shared by push & grasp trunks), cast fused.
    pc = extract_patches(rot_color)                                 # (P, 768) bf16
    pd = extract_patches(rot_depth)

    # Single fused Pallas kernel: merged trunks + both heads.
    # TODO(synk): densenet121 trunks replaced by a 16x16 patch-embed stub.
    o, interm = fused_trunk_head(pc, pd, kparams)

    # Intermediate trunk features already in the module's [push|grasp] channel order:
    # contiguous slices only (no concatenate pass).  Stored in bf16.
    interm = interm.reshape(R, N, HF, WF, C_ALL)
    interm_push = interm[..., :C_CAT].transpose(0, 1, 4, 2, 3)      # (R, N, 128, HF, WF)
    interm_grasp = interm[..., C_CAT:].transpose(0, 1, 4, 2, 3)

    # Head outputs: col 0 = push, col 1 = grasp.
    o = o.reshape(R, N, HF, WF, 2)
    push_out = o[..., 0].reshape(RN, 1, HF, WF)
    grasp_out = o[..., 1].reshape(RN, 1, HF, WF)

    # Rotate predictions back by +theta, then x16 bilinear upsample.
    grid_a = jnp.repeat(affine_grid(thetas_a, HF, WF), N, axis=0)
    push_rot = grid_sample_nearest(push_out, grid_a)
    grasp_rot = grid_sample_nearest(grasp_out, grid_a)
    push_prob = upsample_bilinear(push_rot, PATCH).reshape(R, N, 1, H, W)
    grasp_prob = upsample_bilinear(grasp_rot, PATCH).reshape(R, N, 1, H, W)
    return push_prob, grasp_prob, interm_push, interm_grasp


def _rotation_thetas(rotate_indices):
    tb, ta = [], []
    for rotate_idx in rotate_indices:
        th = np.radians(rotate_idx * (360.0 / NUM_ROTATIONS))
        tb.append([[np.cos(-th), np.sin(-th), 0.0],
                   [-np.sin(-th), np.cos(-th), 0.0]])
        ta.append([[np.cos(th), np.sin(th), 0.0],
                   [-np.sin(th), np.cos(th), 0.0]])
    return (jnp.asarray(np.asarray(tb, np.float32)),
            jnp.asarray(np.asarray(ta, np.float32)))


def push_grasp_net_forward(color, depth, kparams,
                           is_volatile=False, specific_rotation=-1):
    idxs = list(range(NUM_ROTATIONS)) if is_volatile else [specific_rotation]
    thetas_b, thetas_a = _rotation_thetas(idxs)   # rotation enters as data: no retrace
    pp, gp, ip, ig = _forward_batched(color, depth, thetas_b, thetas_a, kparams)
    output_prob = [[pp[r], gp[r]] for r in range(len(idxs))]
    interm_feat = [[ip[r], ig[r]] for r in range(len(idxs))]
    return output_prob, interm_feat


# ---------------- main ----------------
if __name__ == "__main__":
    key = jax.random.PRNGKey(0)
    k_color, k_depth, k_params = jax.random.split(key, 3)
    color = jax.random.normal(k_color, (N, C_IN, H, W), jnp.float32)
    depth = jax.random.normal(k_depth, (N, C_IN, H, W), jnp.float32)
    raw_params = make_raw_params(k_params)
    kparams = prep_kernel_params(raw_params)

    # specific-rotation path (P = N*HF*WF = 32 rows, single block).
    out_prob, interm = push_grasp_net_forward(
        color, depth, kparams, is_volatile=False, specific_rotation=3)
    push_prob, grasp_prob = out_prob[0]
    jax.block_until_ready(push_prob)
    jax.block_until_ready(grasp_prob)
    assert push_prob.shape == (N, 1, H, W)
    assert grasp_prob.shape == (N, 1, H, W)
    assert interm[0][0].shape == (N, C_CAT, HF, WF)

    # volatile path: all 16 rotations batched into ONE fused pallas_call (P = 512).
    out_prob_v, interm_v = push_grasp_net_forward(color, depth, kparams,
                                                  is_volatile=True)
    jax.block_until_ready(out_prob_v[-1][0])
    jax.block_until_ready(out_prob_v[-1][1])
    assert len(out_prob_v) == NUM_ROTATIONS
    assert out_prob_v[0][0].shape == (N, 1, H, W)
    assert interm_v[0][1].shape == (N, C_CAT, HF, WF)

    print("KERNEL_OK")
</pallas_src>

<mosaic_0001>
module attributes {stable_mosaic.version = 11 : i64} {
  func.func private @main(%arg0: i32) attributes {dimension_semantics = [#tpu.dimension_semantics<core_parallel>], iteration_bounds = array<i64: 2>, tpu.core_type = #tpu.core_type<sc_scalar_subcore>, window_params = []} {
    return
  }
}

module attributes {stable_mosaic.version = 11 : i64} {
  func.func private @main(%arg0: i32) attributes {dimension_semantics = [#tpu.dimension_semantics<core_parallel>], iteration_bounds = array<i64: 2>, tpu.core_type = #tpu.core_type<sc_scalar_subcore>, window_params = []} {
    return
  }
}

module attributes {stable_mosaic.version = 11 : i64} {
  func.func @_fused_trunk_head_kernel(%arg0: i32, %arg1: memref<32x768xbf16, #tpu.memory_space<vmem>>, %arg2: memref<32x768xbf16, #tpu.memory_space<vmem>>, %arg3: memref<768x256xbf16, #tpu.memory_space<vmem>>, %arg4: memref<768x256xbf16, #tpu.memory_space<vmem>>, %arg5: memref<256x128xbf16, #tpu.memory_space<vmem>>, %arg6: memref<128x2xf32, #tpu.memory_space<vmem>>, %arg7: memref<8x256xf32, #tpu.memory_space<vmem>>, %arg8: memref<32x2xf32, #tpu.memory_space<vmem>>, %arg9: memref<32x256xbf16, #tpu.memory_space<vmem>>) attributes {dimension_semantics = [#tpu.dimension_semantics<parallel>], iteration_bounds = array<i64: 1>, scalar_prefetch = 0 : i64, scratch_operands = 0 : i64, tpu.core_type = #tpu.core_type<tc>, window_params = [{transform_indices = @transform_0, window_bounds = array<i64: 32, 768>}, {transform_indices = @transform_1, window_bounds = array<i64: 32, 768>}, {pipeline_mode = #tpu.pipeline_mode<synchronous>, transform_indices = @transform_2, window_bounds = array<i64: 768, 256>}, {pipeline_mode = #tpu.pipeline_mode<synchronous>, transform_indices = @transform_3, window_bounds = array<i64: 768, 256>}, {pipeline_mode = #tpu.pipeline_mode<synchronous>, transform_indices = @transform_4, window_bounds = array<i64: 256, 128>}, {pipeline_mode = #tpu.pipeline_mode<synchronous>, transform_indices = @transform_5, window_bounds = array<i64: 128, 2>}, {pipeline_mode = #tpu.pipeline_mode<synchronous>, transform_indices = @transform_6, window_bounds = array<i64: 8, 256>}, {transform_indices = @transform_7, window_bounds = array<i64: 32, 2>}, {transform_indices = @transform_8, window_bounds = array<i64: 32, 256>}]} {
    %c0 = arith.constant 0 : index
    %c0_0 = arith.constant 0 : index
    %0 = vector.load %arg1[%c0, %c0_0] : memref<32x768xbf16, #tpu.memory_space<vmem>>, vector<32x768xbf16>
    %c0_1 = arith.constant 0 : index
    %c0_2 = arith.constant 0 : index
    %1 = vector.load %arg3[%c0_1, %c0_2] : memref<768x256xbf16, #tpu.memory_space<vmem>>, vector<768x256xbf16>
    %cst = arith.constant dense<0.000000e+00> : vector<32x256xf32>
    %2 = tpu.matmul %0, %1, %cst {dimension_numbers = #tpu.dot_dimension_numbers<[1], [0], [0], [1], [0, 0, 1, 1], [], []>} : vector<32x768xbf16>, vector<768x256xbf16>, vector<32x256xf32> -> vector<32x256xf32>
    %c0_3 = arith.constant 0 : index
    %c0_4 = arith.constant 0 : index
    %3 = vector.load %arg2[%c0_3, %c0_4] : memref<32x768xbf16, #tpu.memory_space<vmem>>, vector<32x768xbf16>
    %c0_5 = arith.constant 0 : index
    %c0_6 = arith.constant 0 : index
    %4 = vector.load %arg4[%c0_5, %c0_6] : memref<768x256xbf16, #tpu.memory_space<vmem>>, vector<768x256xbf16>
    %cst_7 = arith.constant dense<0.000000e+00> : vector<32x256xf32>
    %5 = tpu.matmul %3, %4, %cst_7 {dimension_numbers = #tpu.dot_dimension_numbers<[1], [0], [0], [1], [0, 0, 1, 1], [], []>} : vector<32x768xbf16>, vector<768x256xbf16>, vector<32x256xf32> -> vector<32x256xf32>
    %6 = arith.addf %2, %5 : vector<32x256xf32>
    %7 = arith.truncf %6 : vector<32x256xf32> to vector<32x256xbf16>
    %c0_8 = arith.constant 0 : index
    %c0_9 = arith.constant 0 : index
    %8 = vector.load %arg9[%c0_8, %c0_9] : memref<32x256xbf16, #tpu.memory_space<vmem>>, vector<32x256xbf16>
    tpu.vector_store %arg9[%c0_8, %c0_9], %7 {strides = array<i32>} : memref<32x256xbf16, #tpu.memory_space<vmem>>, vector<32x256xbf16>,
    %c0_10 = arith.constant 0 : index
    %c0_11 = arith.constant 0 : index
    %9 = vector.load %arg7[%c0_10, %c0_11] : memref<8x256xf32, #tpu.memory_space<vmem>>, vector<8x256xf32>
    %10 = vector.extract_strided_slice %9 {offsets = [0, 0], sizes = [1, 256], strides = [1, 1]} : vector<8x256xf32> to vector<1x256xf32>
    %11 = vector.extract_strided_slice %9 {offsets = [1, 0], sizes = [1, 256], strides = [1, 1]} : vector<8x256xf32> to vector<1x256xf32>
    %12 = vector.extract_strided_slice %9 {offsets = [2, 0], sizes = [1, 128], strides = [1, 1]} : vector<8x256xf32> to vector<1x128xf32>
    %13 = vector.broadcast %10 : vector<1x256xf32> to vector<32x256xf32>
    %14 = arith.mulf %6, %13 : vector<32x256xf32>
    %15 = vector.broadcast %11 : vector<1x256xf32> to vector<32x256xf32>
    %16 = arith.addf %14, %15 : vector<32x256xf32>
    %cst_12 = arith.constant 0.000000e+00 : f32
    %17 = vector.broadcast %cst_12 : f32 to vector<32x256xf32>
    %18 = arith.maximumf %16, %17 : vector<32x256xf32>
    %19 = arith.truncf %18 : vector<32x256xf32> to vector<32x256xbf16>
    %c0_13 = arith.constant 0 : index
    %c0_14 = arith.constant 0 : index
    %20 = vector.load %arg5[%c0_13, %c0_14] : memref<256x128xbf16, #tpu.memory_space<vmem>>, vector<256x128xbf16>
    %cst_15 = arith.constant dense<0.000000e+00> : vector<32x128xf32>
    %21 = tpu.matmul %19, %20, %cst_15 {dimension_numbers = #tpu.dot_dimension_numbers<[1], [0], [0], [1], [0, 0, 1, 1], [], []>} : vector<32x256xbf16>, vector<256x128xbf16>, vector<32x128xf32> -> vector<32x128xf32>
    %22 = vector.broadcast %12 : vector<1x128xf32> to vector<32x128xf32>
    %23 = arith.addf %21, %22 : vector<32x128xf32>
    %cst_16 = arith.constant 0.000000e+00 : f32
    %24 = vector.broadcast %cst_16 : f32 to vector<32x128xf32>
    %25 = arith.maximumf %23, %24 : vector<32x128xf32>
    %c0_17 = arith.constant 0 : index
    %c0_18 = arith.constant 0 : index
    %26 = vector.load %arg6[%c0_17, %c0_18] : memref<128x2xf32, #tpu.memory_space<vmem>>, vector<128x2xf32>
    %cst_19 = arith.constant dense<0.000000e+00> : vector<32x2xf32>
    %27 = tpu.matmul %25, %26, %cst_19 {dimension_numbers = #tpu.dot_dimension_numbers<[1], [0], [0], [1], [0, 0, 1, 1], [], []>} : vector<32x128xf32>, vector<128x2xf32>, vector<32x2xf32> -> vector<32x2xf32>
    %c0_20 = arith.constant 0 : index
    %c0_21 = arith.constant 0 : index
    %28 = vector.load %arg8[%c0_20, %c0_21] : memref<32x2xf32, #tpu.memory_space<vmem>>, vector<32x2xf32>
    tpu.vector_store %arg8[%c0_20, %c0_21], %27 {strides = array<i32>} : memref<32x2xf32, #tpu.memory_space<vmem>>, vector<32x2xf32>,
    return
  }
  func.func @transform_0(%arg0: i32) -> (i32, i32) {
    %c0_i32 = arith.constant 0 : i32
    %c0_i32_0 = arith.constant 0 : i32
    return %arg0, %c0_i32 : i32, i32
  }
  func.func @transform_1(%arg0: i32) -> (i32, i32) {
    %c0_i32 = arith.constant 0 : i32
    %c0_i32_0 = arith.constant 0 : i32
    return %arg0, %c0_i32 : i32, i32
  }
  func.func @transform_2(%arg0: i32) -> (i32, i32) {
    %c0_i32 = arith.constant 0 : i32
    %c0_i32_0 = arith.constant 0 : i32
    %c0_i32_1 = arith.constant 0 : i32
    return %c0_i32, %c0_i32_0 : i32, i32
  }
  func.func @transform_3(%arg0: i32) -> (i32, i32) {
    %c0_i32 = arith.constant 0 : i32
    %c0_i32_0 = arith.constant 0 : i32
    %c0_i32_1 = arith.constant 0 : i32
    return %c0_i32, %c0_i32_0 : i32, i32
  }
  func.func @transform_4(%arg0: i32) -> (i32, i32) {
    %c0_i32 = arith.constant 0 : i32
    %c0_i32_0 = arith.constant 0 : i32
    %c0_i32_1 = arith.constant 0 : i32
    return %c0_i32, %c0_i32_0 : i32, i32
  }
  func.func @transform_5(%arg0: i32) -> (i32, i32) {
    %c0_i32 = arith.constant 0 : i32
    %c0_i32_0 = arith.constant 0 : i32
    %c0_i32_1 = arith.constant 0 : i32
    return %c0_i32, %c0_i32_0 : i32, i32
  }
  func.func @transform_6(%arg0: i32) -> (i32, i32) {
    %c0_i32 = arith.constant 0 : i32
    %c0_i32_0 = arith.constant 0 : i32
    %c0_i32_1 = arith.constant 0 : i32
    return %c0_i32, %c0_i32_0 : i32, i32
  }
  func.func @transform_7(%arg0: i32) -> (i32, i32) {
    %c0_i32 = arith.constant 0 : i32
    %c0_i32_0 = arith.constant 0 : i32
    return %arg0, %c0_i32 : i32, i32
  }
  func.func @transform_8(%arg0: i32) -> (i32, i32) {
    %c0_i32 = arith.constant 0 : i32
    %c0_i32_0 = arith.constant 0 : i32
    return %arg0, %c0_i32 : i32, i32
  }
}

</mosaic_0001>

<llo_original>
// kernel: _forward_batched.1
$region0: #{_forward_batched.1}
  #allocation0 [shape = 'u32[]', space=smem, size = 0x4, offset = 0x4, fixed_abs, tag = 'smem constant byte address 0x4 - core index']
  #allocation1 [shape = 'u32[144,128]{1,0:T(1,128)}', space=vmem, size = 0x12000, scoped, tag = 'internal scratch']
  %s0 = inlined_call_operand.vmem [shape: bf16[32,768], index: 0, kind: input, shape index: {}]
  %s1 = inlined_call_operand.vmem [shape: bf16[32,768], index: 1, kind: input, shape index: {}]
  %s2 = inlined_call_operand.vmem [shape: bf16[768,256], index: 2, kind: input, shape index: {}]
  %s3 = inlined_call_operand.vmem [shape: bf16[768,256], index: 3, kind: input, shape index: {}]
  %s4 = inlined_call_operand.vmem [shape: bf16[256,128], index: 4, kind: input, shape index: {}]
  %s5 = inlined_call_operand.vmem [shape: f32[128,2], index: 5, kind: input, shape index: {}]
  %s6 = inlined_call_operand.vmem [shape: f32[8,256], index: 6, kind: input, shape index: {}]
  %s7 = inlined_call_operand.vmem [shape: f32[32,2], index: 7, kind: output, shape index: {0}]
  %s8 = inlined_call_operand.vmem [shape: bf16[32,256], index: 8, kind: output, shape index: {1}]
  %9 = xla_tuple %s7, %s8
  %s10 = sld [smem:[#allocation0]]
  $region46: #{_forward_batched.1} parent=0
    _
  %s12 = ssub.s32 1, %s10
  %s13 = scalar_select 0, %s12, %s10
  // Predicated region
  $region2: #{_forward_batched.1} parent=0 // pred_check
    _
  $region3: #{_forward_batched.1} parent=0 // pred_check_branch
    %15 = sbr.rel (0) target = $region5
  $region4: #{_forward_batched.1} parent=0 // pred_region
    _
  $region5: #{_forward_batched.1} parent=0 // pred_fallthru
    _
  // Predicated region
  $region6: #{_forward_batched.1} parent=0 // pred_check
    _
  $region7: #{_forward_batched.1} parent=0 // pred_check_branch
    %17 = sbr.rel (0) target = $region9
  $region8: #{_forward_batched.1} parent=0 // pred_region
    _
  $region9: #{_forward_batched.1} parent=0 // pred_fallthru
    _
  // Predicated region
  $region10: #{_forward_batched.1} parent=0 // pred_check
    _
  $region11: #{_forward_batched.1} parent=0 // pred_check_branch
    %19 = sbr.rel (0) target = $region13
  $region12: #{_forward_batched.1} parent=0 // pred_region
    _
  $region13: #{_forward_batched.1} parent=0 // pred_fallthru
    _
  // Predicated region
  $region14: #{_forward_batched.1} parent=0 // pred_check
    _
  $region15: #{_forward_batched.1} parent=0 // pred_check_branch
    %21 = sbr.rel (0) target = $region17
  $region16: #{_forward_batched.1} parent=0 // pred_region
    _
  $region17: #{_forward_batched.1} parent=0 // pred_fallthru
    _
  // Predicated region
  $region18: #{_forward_batched.1} parent=0 // pred_check
    _
  $region19: #{_forward_batched.1} parent=0 // pred_check_branch
    %23 = sbr.rel (0) target = $region21
  $region20: #{_forward_batched.1} parent=0 // pred_region
    _
  $region21: #{_forward_batched.1} parent=0 // pred_fallthru
    _
  // Predicated region
  $region22: #{_forward_batched.1} parent=0 // pred_check
    _
  $region23: #{_forward_batched.1} parent=0 // pred_check_branch
    %25 = sbr.rel (0) target = $region25
  $region24: #{_forward_batched.1} parent=0 // pred_region
    _
  $region25: #{_forward_batched.1} parent=0 // pred_fallthru
    _
  // Predicated region
  $region26: #{_forward_batched.1} parent=0 // pred_check
    _
  $region27: #{_forward_batched.1} parent=0 // pred_check_branch
    %27 = sbr.rel (0) target = $region29
  $region28: #{_forward_batched.1} parent=0 // pred_region
    _
  $region29: #{_forward_batched.1} parent=0 // pred_fallthru
    _
  %v29 = vld [vmem:[%s0] sm:$0xff]
  %v30 = vld [vmem:[%s0 + $0x8] sm:$0xff]
  %v31 = vld [vmem:[%s0 + $0x10] sm:$0xff]
  %v32 = vld [vmem:[%s0 + $0x18] sm:$0xff]
  %v33 = vld [vmem:[%s0 + $0x20] sm:$0xff]
  %v34 = vld [vmem:[%s0 + $0x28] sm:$0xff]
  %v35 = vld [vmem:[%s0 + $0x30] sm:$0xff]
  %v36 = vld [vmem:[%s0 + $0x38] sm:$0xff]
  %v37 = vld [vmem:[%s0 + $0x40] sm:$0xff]
  %v38 = vld [vmem:[%s0 + $0x48] sm:$0xff]
  %v39 = vld [vmem:[%s0 + $0x50] sm:$0xff]
  %v40 = vld [vmem:[%s0 + $0x58] sm:$0xff]
  %v41 = vld [vmem:[%s2] sm:$0xff]
  %v42 = vld [vmem:[%s2 + $0x8] sm:$0xff]
  %v43 = vld [vmem:[%s2 + $0x10] sm:$0xff]
  %v44 = vld [vmem:[%s2 + $0x18] sm:$0xff]
  %v45 = vld [vmem:[%s2 + $0x20] sm:$0xff]
  %v46 = vld [vmem:[%s2 + $0x28] sm:$0xff]
  %v47 = vld [vmem:[%s2 + $0x30] sm:$0xff]
  %v48 = vld [vmem:[%s2 + $0x38] sm:$0xff]
  %v49 = vld [vmem:[%s2 + $0x40] sm:$0xff]
  %v50 = vld [vmem:[%s2 + $0x48] sm:$0xff]
  %v51 = vld [vmem:[%s2 + $0x50] sm:$0xff]
  %v52 = vld [vmem:[%s2 + $0x58] sm:$0xff]
  %v53 = vld [vmem:[%s2 + $0x60] sm:$0xff]
  %v54 = vld [vmem:[%s2 + $0x68] sm:$0xff]
  %v55 = vld [vmem:[%s2 + $0x70] sm:$0xff]
  %v56 = vld [vmem:[%s2 + $0x78] sm:$0xff]
  %v57 = vld [vmem:[%s2 + $0x80] sm:$0xff]
  %v58 = vld [vmem:[%s2 + $0x88] sm:$0xff]
  %v59 = vld [vmem:[%s2 + $0x90] sm:$0xff]
  %v60 = vld [vmem:[%s2 + $0x98] sm:$0xff]
  %v61 = vld [vmem:[%s2 + $0xa0] sm:$0xff]
  %v62 = vld [vmem:[%s2 + $0xa8] sm:$0xff]
  %v63 = vld [vmem:[%s2 + $0xb0] sm:$0xff]
  %v64 = vld [vmem:[%s2 + $0xb8] sm:$0xff]
  %v65 = vld [vmem:[%s2 + $0xc0] sm:$0xff]
  %v66 = vld [vmem:[%s2 + $0xc8] sm:$0xff]
  %v67 = vld [vmem:[%s2 + $0xd0] sm:$0xff]
  %v68 = vld [vmem:[%s2 + $0xd8] sm:$0xff]
  %v69 = vld [vmem:[%s2 + $0xe0] sm:$0xff]
  %v70 = vld [vmem:[%s2 + $0xe8] sm:$0xff]
  %v71 = vld [vmem:[%s2 + $0xf0] sm:$0xff]
  %v72 = vld [vmem:[%s2 + $0xf8] sm:$0xff]
  %v73 = vld [vmem:[%s2 + $0x100] sm:$0xff]
  %v74 = vld [vmem:[%s2 + $0x108] sm:$0xff]
  %v75 = vld [vmem:[%s2 + $0x110] sm:$0xff]
  %v76 = vld [vmem:[%s2 + $0x118] sm:$0xff]
  %v77 = vld [vmem:[%s2 + $0x120] sm:$0xff]
  %v78 = vld [vmem:[%s2 + $0x128] sm:$0xff]
  %v79 = vld [vmem:[%s2 + $0x130] sm:$0xff]
  %v80 = vld [vmem:[%s2 + $0x138] sm:$0xff]
  %v81 = vld [vmem:[%s2 + $0x140] sm:$0xff]
  %v82 = vld [vmem:[%s2 + $0x148] sm:$0xff]
  %v83 = vld [vmem:[%s2 + $0x150] sm:$0xff]
  %v84 = vld [vmem:[%s2 + $0x158] sm:$0xff]
  %v85 = vld [vmem:[%s2 + $0x160] sm:$0xff]
  %v86 = vld [vmem:[%s2 + $0x168] sm:$0xff]
  %v87 = vld [vmem:[%s2 + $0x170] sm:$0xff]
  %v88 = vld [vmem:[%s2 + $0x178] sm:$0xff]
  %v89 = vld [vmem:[%s2 + $0x180] sm:$0xff]
  %v90 = vld [vmem:[%s2 + $0x188] sm:$0xff]
  %v91 = vld [vmem:[%s2 + $0x190] sm:$0xff]
  %v92 = vld [vmem:[%s2 + $0x198] sm:$0xff]
  %v93 = vld [vmem:[%s2 + $0x1a0] sm:$0xff]
  %v94 = vld [vmem:[%s2 + $0x1a8] sm:$0xff]
  %v95 = vld [vmem:[%s2 + $0x1b0] sm:$0xff]
  %v96 = vld [vmem:[%s2 + $0x1b8] sm:$0xff]
  %v97 = vld [vmem:[%s2 + $0x1c0] sm:$0xff]
  %v98 = vld [vmem:[%s2 + $0x1c8] sm:$0xff]
  %v99 = vld [vmem:[%s2 + $0x1d0] sm:$0xff]
  %v100 = vld [vmem:[%s2 + $0x1d8] sm:$0xff]
  %v101 = vld [vmem:[%s2 + $0x1e0] sm:$0xff]
  %v102 = vld [vmem:[%s2 + $0x1e8] sm:$0xff]
  %v103 = vld [vmem:[%s2 + $0x1f0] sm:$0xff]
  %v104 = vld [vmem:[%s2 + $0x1f8] sm:$0xff]
  %v105 = vld [vmem:[%s2 + $0x200] sm:$0xff]
  %v106 = vld [vmem:[%s2 + $0x208] sm:$0xff]
  %v107 = vld [vmem:[%s2 + $0x210] sm:$0xff]
  %v108 = vld [vmem:[%s2 + $0x218] sm:$0xff]
  %v109 = vld [vmem:[%s2 + $0x220] sm:$0xff]
  %v110 = vld [vmem:[%s2 + $0x228] sm:$0xff]
  %v111 = vld [vmem:[%s2 + $0x230] sm:$0xff]
  %v112 = vld [vmem:[%s2 + $0x238] sm:$0xff]
  %v113 = vld [vmem:[%s2 + $0x240] sm:$0xff]
  %v114 = vld [vmem:[%s2 + $0x248] sm:$0xff]
  %v115 = vld [vmem:[%s2 + $0x250] sm:$0xff]
  %v116 = vld [vmem:[%s2 + $0x258] sm:$0xff]
  %v117 = vld [vmem:[%s2 + $0x260] sm:$0xff]
  %v118 = vld [vmem:[%s2 + $0x268] sm:$0xff]
  %v119 = vld [vmem:[%s2 + $0x270] sm:$0xff]
  %v120 = vld [vmem:[%s2 + $0x278] sm:$0xff]
  %v121 = vld [vmem:[%s2 + $0x280] sm:$0xff]
  %v122 = vld [vmem:[%s2 + $0x288] sm:$0xff]
  %v123 = vld [vmem:[%s2 + $0x290] sm:$0xff]
  %v124 = vld [vmem:[%s2 + $0x298] sm:$0xff]
  %v125 = vld [vmem:[%s2 + $0x2a0] sm:$0xff]
  %v126 = vld [vmem:[%s2 + $0x2a8] sm:$0xff]
  %v127 = vld [vmem:[%s2 + $0x2b0] sm:$0xff]
  %v128 = vld [vmem:[%s2 + $0x2b8] sm:$0xff]
  %v129 = vld [vmem:[%s2 + $0x2c0] sm:$0xff]
  %v130 = vld [vmem:[%s2 + $0x2c8] sm:$0xff]
  %v131 = vld [vmem:[%s2 + $0x2d0] sm:$0xff]
  %v132 = vld [vmem:[%s2 + $0x2d8] sm:$0xff]
  %v133 = vld [vmem:[%s2 + $0x2e0] sm:$0xff]
  %v134 = vld [vmem:[%s2 + $0x2e8] sm:$0xff]
  %v135 = vld [vmem:[%s2 + $0x2f0] sm:$0xff]
  %v136 = vld [vmem:[%s2 + $0x2f8] sm:$0xff]
  %v137 = vld [vmem:[%s1] sm:$0xff]
  %v138 = vld [vmem:[%s1 + $0x8] sm:$0xff]
  %v139 = vld [vmem:[%s1 + $0x10] sm:$0xff]
  %v140 = vld [vmem:[%s1 + $0x18] sm:$0xff]
  %v141 = vld [vmem:[%s1 + $0x20] sm:$0xff]
  %v142 = vld [vmem:[%s1 + $0x28] sm:$0xff]
  %v143 = vld [vmem:[%s1 + $0x30] sm:$0xff]
  %v144 = vld [vmem:[%s1 + $0x38] sm:$0xff]
  %v145 = vld [vmem:[%s1 + $0x40] sm:$0xff]
  %v146 = vld [vmem:[%s1 + $0x48] sm:$0xff]
  %v147 = vld [vmem:[%s1 + $0x50] sm:$0xff]
  %v148 = vld [vmem:[%s1 + $0x58] sm:$0xff]
  %v149 = vld [vmem:[%s3] sm:$0xff]
  %v150 = vld [vmem:[%s3 + $0x8] sm:$0xff]
  %v151 = vld [vmem:[%s3 + $0x10] sm:$0xff]
  %v152 = vld [vmem:[%s3 + $0x18] sm:$0xff]
  %v153 = vld [vmem:[%s3 + $0x20] sm:$0xff]
  %v154 = vld [vmem:[%s3 + $0x28] sm:$0xff]
  %v155 = vld [vmem:[%s3 + $0x30] sm:$0xff]
  %v156 = vld [vmem:[%s3 + $0x38] sm:$0xff]
  %v157 = vld [vmem:[%s3 + $0x40] sm:$0xff]
  %v158 = vld [vmem:[%s3 + $0x48] sm:$0xff]
  %v159 = vld [vmem:[%s3 + $0x50] sm:$0xff]
  %v160 = vld [vmem:[%s3 + $0x58] sm:$0xff]
  %v161 = vld [vmem:[%s3 + $0x60] sm:$0xff]
  %v162 = vld [vmem:[%s3 + $0x68] sm:$0xff]
  %v163 = vld [vmem:[%s3 + $0x70] sm:$0xff]
  %v164 = vld [vmem:[%s3 + $0x78] sm:$0xff]
  %v165 = vld [vmem:[%s3 + $0x80] sm:$0xff]
  %v166 = vld [vmem:[%s3 + $0x88] sm:$0xff]
  %v167 = vld [vmem:[%s3 + $0x90] sm:$0xff]
  %v168 = vld [vmem:[%s3 + $0x98] sm:$0xff]
  %v169 = vld [vmem:[%s3 + $0xa0] sm:$0xff]
  %v170 = vld [vmem:[%s3 + $0xa8] sm:$0xff]
  %v171 = vld [vmem:[%s3 + $0xb0] sm:$0xff]
  %v172 = vld [vmem:[%s3 + $0xb8] sm:$0xff]
  %v173 = vld [vmem:[%s3 + $0xc0] sm:$0xff]
  %v174 = vld [vmem:[%s3 + $0xc8] sm:$0xff]
  %v175 = vld [vmem:[%s3 + $0xd0] sm:$0xff]
  %v176 = vld [vmem:[%s3 + $0xd8] sm:$0xff]
  %v177 = vld [vmem:[%s3 + $0xe0] sm:$0xff]
  %v178 = vld [vmem:[%s3 + $0xe8] sm:$0xff]
  %v179 = vld [vmem:[%s3 + $0xf0] sm:$0xff]
  %v180 = vld [vmem:[%s3 + $0xf8] sm:$0xff]
  %v181 = vld [vmem:[%s3 + $0x100] sm:$0xff]
  %v182 = vld [vmem:[%s3 + $0x108] sm:$0xff]
  %v183 = vld [vmem:[%s3 + $0x110] sm:$0xff]
  %v184 = vld [vmem:[%s3 + $0x118] sm:$0xff]
  %v185 = vld [vmem:[%s3 + $0x120] sm:$0xff]
  %v186 = vld [vmem:[%s3 + $0x128] sm:$0xff]
  %v187 = vld [vmem:[%s3 + $0x130] sm:$0xff]
  %v188 = vld [vmem:[%s3 + $0x138] sm:$0xff]
  %v189 = vld [vmem:[%s3 + $0x140] sm:$0xff]
  %v190 = vld [vmem:[%s3 + $0x148] sm:$0xff]
  %v191 = vld [vmem:[%s3 + $0x150] sm:$0xff]
  %v192 = vld [vmem:[%s3 + $0x158] sm:$0xff]
  %v193 = vld [vmem:[%s3 + $0x160] sm:$0xff]
  %v194 = vld [vmem:[%s3 + $0x168] sm:$0xff]
  %v195 = vld [vmem:[%s3 + $0x170] sm:$0xff]
  %v196 = vld [vmem:[%s3 + $0x178] sm:$0xff]
  %v197 = vld [vmem:[%s3 + $0x180] sm:$0xff]
  %v198 = vld [vmem:[%s3 + $0x188] sm:$0xff]
  %v199 = vld [vmem:[%s3 + $0x190] sm:$0xff]
  %v200 = vld [vmem:[%s3 + $0x198] sm:$0xff]
  %v201 = vld [vmem:[%s3 + $0x1a0] sm:$0xff]
  %v202 = vld [vmem:[%s3 + $0x1a8] sm:$0xff]
  %v203 = vld [vmem:[%s3 + $0x1b0] sm:$0xff]
  %v204 = vld [vmem:[%s3 + $0x1b8] sm:$0xff]
  %v205 = vld [vmem:[%s3 + $0x1c0] sm:$0xff]
  %v206 = vld [vmem:[%s3 + $0x1c8] sm:$0xff]
  %v207 = vld [vmem:[%s3 + $0x1d0] sm:$0xff]
  %v208 = vld [vmem:[%s3 + $0x1d8] sm:$0xff]
  %v209 = vld [vmem:[%s3 + $0x1e0] sm:$0xff]
  %v210 = vld [vmem:[%s3 + $0x1e8] sm:$0xff]
  %v211 = vld [vmem:[%s3 + $0x1f0] sm:$0xff]
  %v212 = vld [vmem:[%s3 + $0x1f8] sm:$0xff]
  %v213 = vld [vmem:[%s3 + $0x200] sm:$0xff]
  %v214 = vld [vmem:[%s3 + $0x208] sm:$0xff]
  %v215 = vld [vmem:[%s3 + $0x210] sm:$0xff]
  %v216 = vld [vmem:[%s3 + $0x218] sm:$0xff]
  %v217 = vld [vmem:[%s3 + $0x220] sm:$0xff]
  %v218 = vld [vmem:[%s3 + $0x228] sm:$0xff]
  %v219 = vld [vmem:[%s3 + $0x230] sm:$0xff]
  %v220 = vld [vmem:[%s3 + $0x238] sm:$0xff]
  %v221 = vld [vmem:[%s3 + $0x240] sm:$0xff]
  %v222 = vld [vmem:[%s3 + $0x248] sm:$0xff]
  %v223 = vld [vmem:[%s3 + $0x250] sm:$0xff]
  %v224 = vld [vmem:[%s3 + $0x258] sm:$0xff]
  %v225 = vld [vmem:[%s3 + $0x260] sm:$0xff]
  %v226 = vld [vmem:[%s3 + $0x268] sm:$0xff]
  %v227 = vld [vmem:[%s3 + $0x270] sm:$0xff]
  %v228 = vld [vmem:[%s3 + $0x278] sm:$0xff]
  %v229 = vld [vmem:[%s3 + $0x280] sm:$0xff]
  %v230 = vld [vmem:[%s3 + $0x288] sm:$0xff]
  %v231 = vld [vmem:[%s3 + $0x290] sm:$0xff]
  %v232 = vld [vmem:[%s3 + $0x298] sm:$0xff]
  %v233 = vld [vmem:[%s3 + $0x2a0] sm:$0xff]
  %v234 = vld [vmem:[%s3 + $0x2a8] sm:$0xff]
  %v235 = vld [vmem:[%s3 + $0x2b0] sm:$0xff]
  %v236 = vld [vmem:[%s3 + $0x2b8] sm:$0xff]
  %v237 = vld [vmem:[%s3 + $0x2c0] sm:$0xff]
  %v238 = vld [vmem:[%s3 + $0x2c8] sm:$0xff]
  %v239 = vld [vmem:[%s3 + $0x2d0] sm:$0xff]
  %v240 = vld [vmem:[%s3 + $0x2d8] sm:$0xff]
  %v241 = vld [vmem:[%s3 + $0x2e0] sm:$0xff]
  %v242 = vld [vmem:[%s3 + $0x2e8] sm:$0xff]
  %v243 = vld [vmem:[%s3 + $0x2f0] sm:$0xff]
  %v244 = vld [vmem:[%s3 + $0x2f8] sm:$0xff]
  %v257 = vunpack.c.l.b16 %v137
  %v258 = vunpack.c.h.b16 %v137
  %v259 = vunpack.c.l.b16 %v138
  %v260 = vunpack.c.h.b16 %v138
  %v261 = vunpack.c.l.b16 %v139
  %v262 = vunpack.c.h.b16 %v139
  %v263 = vunpack.c.l.b16 %v140
  %v264 = vunpack.c.h.b16 %v140
  %v265 = vunpack.c.l.b16 %v141
  %v266 = vunpack.c.h.b16 %v141
  %v267 = vunpack.c.l.b16 %v142
  %v268 = vunpack.c.h.b16 %v142
  %v269 = vunpack.c.l.b16 %v143
  %v270 = vunpack.c.h.b16 %v143
  %v271 = vunpack.c.l.b16 %v144
  %v272 = vunpack.c.h.b16 %v144
  %v273 = vunpack.c.l.b16 %v145
  %v274 = vunpack.c.h.b16 %v145
  %v275 = vunpack.c.l.b16 %v146
  %v276 = vunpack.c.h.b16 %v146
  %v277 = vunpack.c.l.b16 %v147
  %v278 = vunpack.c.h.b16 %v147
  %v279 = vunpack.c.l.b16 %v148
  %v280 = vunpack.c.h.b16 %v148
  %v281 = vpack.c.b16 %v263, %v257
  %v282 = vpack.c.b16 %v264, %v258
  %v283 = vpack.c.b16 %v265, %v259
  %v284 = vpack.c.b16 %v266, %v260
  %v285 = vpack.c.b16 %v267, %v261
  %v286 = vpack.c.b16 %v268, %v262
  %v287 = vpack.c.b16 %v275, %v269
  %v288 = vpack.c.b16 %v276, %v270
  %v289 = vpack.c.b16 %v277, %v271
  %v290 = vpack.c.b16 %v278, %v272
  %v291 = vpack.c.b16 %v279, %v273
  %v292 = vpack.c.b16 %v280, %v274
  %v401 = vunpack.c.l.b16 %v149
  %v402 = vunpack.c.h.b16 %v149
  %v403 = vunpack.c.l.b16 %v150
  %v404 = vunpack.c.h.b16 %v150
  %v405 = vunpack.c.l.b16 %v151
  %v406 = vunpack.c.h.b16 %v151
  %v407 = vunpack.c.l.b16 %v152
  %v408 = vunpack.c.h.b16 %v152
  %v409 = vunpack.c.l.b16 %v153
  %v410 = vunpack.c.h.b16 %v153
  %v411 = vunpack.c.l.b16 %v154
  %v412 = vunpack.c.h.b16 %v154
  %v413 = vunpack.c.l.b16 %v155
  %v414 = vunpack.c.h.b16 %v155
  %v415 = vunpack.c.l.b16 %v156
  %v416 = vunpack.c.h.b16 %v156
  %v417 = vunpack.c.l.b16 %v157
  %v418 = vunpack.c.h.b16 %v157
  %v419 = vunpack.c.l.b16 %v158
  %v420 = vunpack.c.h.b16 %v158
  %v421 = vunpack.c.l.b16 %v159
  %v422 = vunpack.c.h.b16 %v159
  %v423 = vunpack.c.l.b16 %v160
  %v424 = vunpack.c.h.b16 %v160
  %v425 = vunpack.c.l.b16 %v161
  %v426 = vunpack.c.h.b16 %v161
  %v427 = vunpack.c.l.b16 %v162
  %v428 = vunpack.c.h.b16 %v162
  %v429 = vunpack.c.l.b16 %v163
  %v430 = vunpack.c.h.b16 %v163
  %v431 = vunpack.c.l.b16 %v164
  %v432 = vunpack.c.h.b16 %v164
  %v433 = vunpack.c.l.b16 %v165
  %v434 = vunpack.c.h.b16 %v165
  %v435 = vunpack.c.l.b16 %v166
  %v436 = vunpack.c.h.b16 %v166
  %v437 = vunpack.c.l.b16 %v167
  %v438 = vunpack.c.h.b16 %v167
  %v439 = vunpack.c.l.b16 %v168
  %v440 = vunpack.c.h.b16 %v168
  %v441 = vunpack.c.l.b16 %v169
  %v442 = vunpack.c.h.b16 %v169
  %v443 = vunpack.c.l.b16 %v170
  %v444 = vunpack.c.h.b16 %v170
  %v445 = vunpack.c.l.b16 %v171
  %v446 = vunpack.c.h.b16 %v171
  %v447 = vunpack.c.l.b16 %v172
  %v448 = vunpack.c.h.b16 %v172
  %v449 = vunpack.c.l.b16 %v173
  %v450 = vunpack.c.h.b16 %v173
  %v451 = vunpack.c.l.b16 %v174
  %v452 = vunpack.c.h.b16 %v174
  %v453 = vunpack.c.l.b16 %v175
  %v454 = vunpack.c.h.b16 %v175
  %v455 = vunpack.c.l.b16 %v176
  %v456 = vunpack.c.h.b16 %v176
  %v457 = vunpack.c.l.b16 %v177
  %v458 = vunpack.c.h.b16 %v177
  %v459 = vunpack.c.l.b16 %v178
  %v460 = vunpack.c.h.b16 %v178
  %v461 = vunpack.c.l.b16 %v179
  %v462 = vunpack.c.h.b16 %v179
  %v463 = vunpack.c.l.b16 %v180
  %v464 = vunpack.c.h.b16 %v180
  %v465 = vunpack.c.l.b16 %v181
  %v466 = vunpack.c.h.b16 %v181
  %v467 = vunpack.c.l.b16 %v182
  %v468 = vunpack.c.h.b16 %v182
  %v469 = vunpack.c.l.b16 %v183
  %v470 = vunpack.c.h.b16 %v183
  %v471 = vunpack.c.l.b16 %v184
  %v472 = vunpack.c.h.b16 %v184
  %v473 = vunpack.c.l.b16 %v185
  %v474 = vunpack.c.h.b16 %v185
  %v475 = vunpack.c.l.b16 %v186
  %v476 = vunpack.c.h.b16 %v186
  %v477 = vunpack.c.l.b16 %v187
  %v478 = vunpack.c.h.b16 %v187
  %v479 = vunpack.c.l.b16 %v188
  %v480 = vunpack.c.h.b16 %v188
  %v481 = vunpack.c.l.b16 %v189
  %v482 = vunpack.c.h.b16 %v189
  %v483 = vunpack.c.l.b16 %v190
  %v484 = vunpack.c.h.b16 %v190
  %v485 = vunpack.c.l.b16 %v191
  %v486 = vunpack.c.h.b16 %v191
  %v487 = vunpack.c.l.b16 %v192
  %v488 = vunpack.c.h.b16 %v192
  %v489 = vunpack.c.l.b16 %v193
  %v490 = vunpack.c.h.b16 %v193
  %v491 = vunpack.c.l.b16 %v194
  %v492 = vunpack.c.h.b16 %v194
  %v493 = vunpack.c.l.b16 %v195
  %v494 = vunpack.c.h.b16 %v195
  %v495 = vunpack.c.l.b16 %v196
  %v496 = vunpack.c.h.b16 %v196
  %v497 = vunpack.c.l.b16 %v197
  %v498 = vunpack.c.h.b16 %v197
  %v499 = vunpack.c.l.b16 %v198
  %v500 = vunpack.c.h.b16 %v198
  %v501 = vunpack.c.l.b16 %v199
  %v502 = vunpack.c.h.b16 %v199
  %v503 = vunpack.c.l.b16 %v200
  %v504 = vunpack.c.h.b16 %v200
  %v505 = vunpack.c.l.b16 %v201
  %v506 = vunpack.c.h.b16 %v201
  %v507 = vunpack.c.l.b16 %v202
  %v508 = vunpack.c.h.b16 %v202
  %v509 = vunpack.c.l.b16 %v203
  %v510 = vunpack.c.h.b16 %v203
  %v511 = vunpack.c.l.b16 %v204
  %v512 = vunpack.c.h.b16 %v204
  %v513 = vunpack.c.l.b16 %v205
  %v514 = vunpack.c.h.b16 %v205
  %v515 = vunpack.c.l.b16 %v206
  %v516 = vunpack.c.h.b16 %v206
  %v517 = vunpack.c.l.b16 %v207
  %v518 = vunpack.c.h.b16 %v207
  %v519 = vunpack.c.l.b16 %v208
  %v520 = vunpack.c.h.b16 %v208
  %v521 = vunpack.c.l.b16 %v209
  %v522 = vunpack.c.h.b16 %v209
  %v523 = vunpack.c.l.b16 %v210
  %v524 = vunpack.c.h.b16 %v210
  %v525 = vunpack.c.l.b16 %v211
  %v526 = vunpack.c.h.b16 %v211
  %v527 = vunpack.c.l.b16 %v212
  %v528 = vunpack.c.h.b16 %v212
  %v529 = vunpack.c.l.b16 %v213
  %v530 = vunpack.c.h.b16 %v213
  %v531 = vunpack.c.l.b16 %v214
  %v532 = vunpack.c.h.b16 %v214
  %v533 = vunpack.c.l.b16 %v215
  %v534 = vunpack.c.h.b16 %v215
  %v535 = vunpack.c.l.b16 %v216
  %v536 = vunpack.c.h.b16 %v216
  %v537 = vunpack.c.l.b16 %v217
  %v538 = vunpack.c.h.b16 %v217
  %v539 = vunpack.c.l.b16 %v218
  %v540 = vunpack.c.h.b16 %v218
  %v541 = vunpack.c.l.b16 %v219
  %v542 = vunpack.c.h.b16 %v219
  %v543 = vunpack.c.l.b16 %v220
  %v544 = vunpack.c.h.b16 %v220
  %v545 = vunpack.c.l.b16 %v221
  %v546 = vunpack.c.h.b16 %v221
  %v547 = vunpack.c.l.b16 %v222
  %v548 = vunpack.c.h.b16 %v222
  %v549 = vunpack.c.l.b16 %v223
  %v550 = vunpack.c.h.b16 %v223
  %v551 = vunpack.c.l.b16 %v224
  %v552 = vunpack.c.h.b16 %v224
  %v553 = vunpack.c.l.b16 %v225
  %v554 = vunpack.c.h.b16 %v225
  %v555 = vunpack.c.l.b16 %v226
  %v556 = vunpack.c.h.b16 %v226
  %v557 = vunpack.c.l.b16 %v227
  %v558 = vunpack.c.h.b16 %v227
  %v559 = vunpack.c.l.b16 %v228
  %v560 = vunpack.c.h.b16 %v228
  %v561 = vunpack.c.l.b16 %v229
  %v562 = vunpack.c.h.b16 %v229
  %v563 = vunpack.c.l.b16 %v230
  %v564 = vunpack.c.h.b16 %v230
  %v565 = vunpack.c.l.b16 %v231
  %v566 = vunpack.c.h.b16 %v231
  %v567 = vunpack.c.l.b16 %v232
  %v568 = vunpack.c.h.b16 %v232
  %v569 = vunpack.c.l.b16 %v233
  %v570 = vunpack.c.h.b16 %v233
  %v571 = vunpack.c.l.b16 %v234
  %v572 = vunpack.c.h.b16 %v234
  %v573 = vunpack.c.l.b16 %v235
  %v574 = vunpack.c.h.b16 %v235
  %v575 = vunpack.c.l.b16 %v236
  %v576 = vunpack.c.h.b16 %v236
  %v577 = vunpack.c.l.b16 %v237
  %v578 = vunpack.c.h.b16 %v237
  %v579 = vunpack.c.l.b16 %v238
  %v580 = vunpack.c.h.b16 %v238
  %v581 = vunpack.c.l.b16 %v239
  %v582 = vunpack.c.h.b16 %v239
  %v583 = vunpack.c.l.b16 %v240
  %v584 = vunpack.c.h.b16 %v240
  %v585 = vunpack.c.l.b16 %v241
  %v586 = vunpack.c.h.b16 %v241
  %v587 = vunpack.c.l.b16 %v242
  %v588 = vunpack.c.h.b16 %v242
  %v589 = vunpack.c.l.b16 %v243
  %v590 = vunpack.c.h.b16 %v243
  %v591 = vunpack.c.l.b16 %v244
  %v592 = vunpack.c.h.b16 %v244
  %v593 = vpack.c.b16 %v403, %v401
  %v594 = vpack.c.b16 %v404, %v402
  %v595 = vpack.c.b16 %v407, %v405
  %v596 = vpack.c.b16 %v408, %v406
  %v597 = vpack.c.b16 %v411, %v409
  %v598 = vpack.c.b16 %v412, %v410
  %v599 = vpack.c.b16 %v415, %v413
  %v600 = vpack.c.b16 %v416, %v414
  %v601 = vpack.c.b16 %v419, %v417
  %v602 = vpack.c.b16 %v420, %v418
  %v603 = vpack.c.b16 %v423, %v421
  %v604 = vpack.c.b16 %v424, %v422
  %v605 = vpack.c.b16 %v427, %v425
  %v606 = vpack.c.b16 %v428, %v426
  %v607 = vpack.c.b16 %v431, %v429
  %v608 = vpack.c.b16 %v432, %v430
  %v609 = vpack.c.b16 %v435, %v433
  %v610 = vpack.c.b16 %v436, %v434
  %v611 = vpack.c.b16 %v439, %v437
  %v612 = vpack.c.b16 %v440, %v438
  %v613 = vpack.c.b16 %v443, %v441
  %v614 = vpack.c.b16 %v444, %v442
  %v615 = vpack.c.b16 %v447, %v445
  %v616 = vpack.c.b16 %v448, %v446
  %v617 = vpack.c.b16 %v451, %v449
  %v618 = vpack.c.b16 %v452, %v450
  %v619 = vpack.c.b16 %v455, %v453
  %v620 = vpack.c.b16 %v456, %v454
  %v621 = vpack.c.b16 %v459, %v457
  %v622 = vpack.c.b16 %v460, %v458
  %v623 = vpack.c.b16 %v463, %v461
  %v624 = vpack.c.b16 %v464, %v462
  %v625 = vpack.c.b16 %v467, %v465
  %v626 = vpack.c.b16 %v468, %v466
  %v627 = vpack.c.b16 %v471, %v469
  %v628 = vpack.c.b16 %v472, %v470
  %v629 = vpack.c.b16 %v475, %v473
  %v630 = vpack.c.b16 %v476, %v474
  %v631 = vpack.c.b16 %v479, %v477
  %v632 = vpack.c.b16 %v480, %v478
  %v633 = vpack.c.b16 %v483, %v481
  %v634 = vpack.c.b16 %v484, %v482
  %v635 = vpack.c.b16 %v487, %v485
  %v636 = vpack.c.b16 %v488, %v486
  %v637 = vpack.c.b16 %v491, %v489
  %v638 = vpack.c.b16 %v492, %v490
  %v639 = vpack.c.b16 %v495, %v493
  %v640 = vpack.c.b16 %v496, %v494
  %v641 = vpack.c.b16 %v499, %v497
  %v642 = vpack.c.b16 %v500, %v498
  %v643 = vpack.c.b16 %v503, %v501
  %v644 = vpack.c.b16 %v504, %v502
  %v645 = vpack.c.b16 %v507, %v505
  %v646 = vpack.c.b16 %v508, %v506
  %v647 = vpack.c.b16 %v511, %v509
  %v648 = vpack.c.b16 %v512, %v510
  %v649 = vpack.c.b16 %v515, %v513
  %v650 = vpack.c.b16 %v516, %v514
  %v651 = vpack.c.b16 %v519, %v517
  %v652 = vpack.c.b16 %v520, %v518
  %v653 = vpack.c.b16 %v523, %v521
  %v654 = vpack.c.b16 %v524, %v522
  %v655 = vpack.c.b16 %v527, %v525
  %v656 = vpack.c.b16 %v528, %v526
  %v657 = vpack.c.b16 %v531, %v529
  %v658 = vpack.c.b16 %v532, %v530
  %v659 = vpack.c.b16 %v535, %v533
  %v660 = vpack.c.b16 %v536, %v534
  %v661 = vpack.c.b16 %v539, %v537
  %v662 = vpack.c.b16 %v540, %v538
  %v663 = vpack.c.b16 %v543, %v541
  %v664 = vpack.c.b16 %v544, %v542
  %v665 = vpack.c.b16 %v547, %v545
  %v666 = vpack.c.b16 %v548, %v546
  %v667 = vpack.c.b16 %v551, %v549
  %v668 = vpack.c.b16 %v552, %v550
  %v669 = vpack.c.b16 %v555, %v553
  %v670 = vpack.c.b16 %v556, %v554
  %v671 = vpack.c.b16 %v559, %v557
  %v672 = vpack.c.b16 %v560, %v558
  %v673 = vpack.c.b16 %v563, %v561
  %v674 = vpack.c.b16 %v564, %v562
  %v675 = vpack.c.b16 %v567, %v565
  %v676 = vpack.c.b16 %v568, %v566
  %v677 = vpack.c.b16 %v571, %v569
  %v678 = vpack.c.b16 %v572, %v570
  %v679 = vpack.c.b16 %v575, %v573
  %v680 = vpack.c.b16 %v576, %v574
  %v681 = vpack.c.b16 %v579, %v577
  %v682 = vpack.c.b16 %v580, %v578
  %v683 = vpack.c.b16 %v583, %v581
  %v684 = vpack.c.b16 %v584, %v582
  %v685 = vpack.c.b16 %v587, %v585
  %v686 = vpack.c.b16 %v588, %v586
  %v687 = vpack.c.b16 %v591, %v589
  %v688 = vpack.c.b16 %v592, %v590
  %785 = vmatprep.subr.bf16.mxu0 %v594
  %786 = vmatpush1.bf16.msra.mxu0 %v593
  %787 = vmatprep.subr.bf16.mxu0 %v596
  %788 = vmatpush1.bf16.msra.mxu0 %v595
  %789 = vmatprep.subr.bf16.mxu0 %v598
  %790 = vmatpush1.bf16.msra.mxu0 %v597
  %791 = vmatprep.subr.bf16.mxu0 %v600
  %792 = vmatpush1.bf16.msra.mxu0 %v599
  %793 = vmatprep.subr.bf16.mxu0 %v602
  %794 = vmatpush1.bf16.msra.mxu0 %v601
  %795 = vmatprep.subr.bf16.mxu0 %v604
  %796 = vmatpush1.bf16.msra.mxu0 %v603
  %797 = vmatprep.subr.bf16.mxu0 %v606
  %798 = vmatpush1.bf16.msra.mxu0 %v605
  %799 = vmatprep.subr.bf16.mxu0 %v608
  %800 = vmatpush1.bf16.msra.mxu0 %v607
  %801 = vmatprep.subr.bf16.mxu0 %v610
  %802 = vmatpush1.bf16.msra.mxu0 %v609
  %803 = vmatprep.subr.bf16.mxu0 %v612
  %804 = vmatpush1.bf16.msra.mxu0 %v611
  %805 = vmatprep.subr.bf16.mxu0 %v614
  %806 = vmatpush1.bf16.msra.mxu0 %v613
  %807 = vmatprep.subr.bf16.mxu0 %v616
  %808 = vmatpush1.bf16.msra.mxu0 %v615
  %809 = vmatprep.subr.bf16.mxu0 %v618
  %810 = vmatpush1.bf16.msra.mxu0 %v617
  %811 = vmatprep.subr.bf16.mxu0 %v620
  %812 = vmatpush1.bf16.msra.mxu0 %v619
  %813 = vmatprep.subr.bf16.mxu0 %v622
  %814 = vmatpush1.bf16.msra.mxu0 %v621
  %815 = vmatprep.subr.bf16.mxu0 %v624
  %816 = vmatpush1.bf16.msra.mxu0 %v623
  %817 = vmatprep.mubr.bf16.mxu0 %v282
  %818 = vmatmul.mubr.bf16.gmra.mrb[0].mxu0 %v281
  %v819 = vpop.f32.mrb[0].mxu0
  %v820 = vadd.f32 0.0, %v819
  %v821 = vpop.f32.mrb[0].mxu0
  %v822 = vadd.f32 0.0, %v821
  %v823 = vpop.f32.mrb[0].mxu0
  %v824 = vadd.f32 0.0, %v823
  %v825 = vpop.f32.mrb[0].mxu0
  %v826 = vadd.f32 0.0, %v825
  %827 = vmatprep.mubr.bf16.mxu0 %v288
  %828 = vmatmul.mubr.bf16.gmra.mrb[0].mxu0 %v287
  %v829 = vpop.f32.mrb[0].mxu0
  %v830 = vadd.f32 0.0, %v829
  %v831 = vpop.f32.mrb[0].mxu0
  %v832 = vadd.f32 0.0, %v831
  %v833 = vpop.f32.mrb[0].mxu0
  %v834 = vadd.f32 0.0, %v833
  %v835 = vpop.f32.mrb[0].mxu0
  %v836 = vadd.f32 0.0, %v835
  %837 = vdwg.mxu0
  %838 = vmatprep.subr.bf16.mxu0 %v626
  %839 = vmatpush1.bf16.msra.mxu0 %v625
  %840 = vmatprep.subr.bf16.mxu0 %v628
  %841 = vmatpush1.bf16.msra.mxu0 %v627
  %842 = vmatprep.subr.bf16.mxu0 %v630
  %843 = vmatpush1.bf16.msra.mxu0 %v629
  %844 = vmatprep.subr.bf16.mxu0 %v632
  %845 = vmatpush1.bf16.msra.mxu0 %v631
  %846 = vmatprep.subr.bf16.mxu0 %v634
  %847 = vmatpush1.bf16.msra.mxu0 %v633
  %848 = vmatprep.subr.bf16.mxu0 %v636
  %849 = vmatpush1.bf16.msra.mxu0 %v635
  %850 = vmatprep.subr.bf16.mxu0 %v638
  %851 = vmatpush1.bf16.msra.mxu0 %v637
  %852 = vmatprep.subr.bf16.mxu0 %v640
  %853 = vmatpush1.bf16.msra.mxu0 %v639
  %854 = vmatprep.subr.bf16.mxu0 %v642
  %855 = vmatpush1.bf16.msra.mxu0 %v641
  %856 = vmatprep.subr.bf16.mxu0 %v644
  %857 = vmatpush1.bf16.msra.mxu0 %v643
  %858 = vmatprep.subr.bf16.mxu0 %v646
  %859 = vmatpush1.bf16.msra.mxu0 %v645
  %860 = vmatprep.subr.bf16.mxu0 %v648
  %861 = vmatpush1.bf16.msra.mxu0 %v647
  %862 = vmatprep.subr.bf16.mxu0 %v650
  %863 = vmatpush1.bf16.msra.mxu0 %v649
  %864 = vmatprep.subr.bf16.mxu0 %v652
  %865 = vmatpush1.bf16.msra.mxu0 %v651
  %866 = vmatprep.subr.bf16.mxu0 %v654
  %867 = vmatpush1.bf16.msra.mxu0 %v653
  %868 = vmatprep.subr.bf16.mxu0 %v656
  %869 = vmatpush1.bf16.msra.mxu0 %v655
  %870 = vmatprep.mubr.bf16.mxu0 %v284
  %871 = vmatmul.mubr.bf16.gmra.mrb[0].mxu0 %v283
  %v872 = vpop.f32.mrb[0].mxu0
  %v873 = vadd.f32 %v820, %v872
  %v874 = vpop.f32.mrb[0].mxu0
  %v875 = vadd.f32 %v822, %v874
  %v876 = vpop.f32.mrb[0].mxu0
  %v877 = vadd.f32 %v824, %v876
  %v878 = vpop.f32.mrb[0].mxu0
  %v879 = vadd.f32 %v826, %v878
  %880 = vmatprep.mubr.bf16.mxu0 %v290
  %881 = vmatmul.mubr.bf16.gmra.mrb[0].mxu0 %v289
  %v882 = vpop.f32.mrb[0].mxu0
  %v883 = vadd.f32 %v830, %v882
  %v884 = vpop.f32.mrb[0].mxu0
  %v885 = vadd.f32 %v832, %v884
  %v886 = vpop.f32.mrb[0].mxu0
  %v887 = vadd.f32 %v834, %v886
  %v888 = vpop.f32.mrb[0].mxu0
  %v889 = vadd.f32 %v836, %v888
  %890 = vdwg.mxu0
  %891 = vmatprep.subr.bf16.mxu0 %v658
  %892 = vmatpush1.bf16.msra.mxu0 %v657
  %893 = vmatprep.subr.bf16.mxu0 %v660
  %894 = vmatpush1.bf16.msra.mxu0 %v659
  %895 = vmatprep.subr.bf16.mxu0 %v662
  %896 = vmatpush1.bf16.msra.mxu0 %v661
  %897 = vmatprep.subr.bf16.mxu0 %v664
  %898 = vmatpush1.bf16.msra.mxu0 %v663
  %899 = vmatprep.subr.bf16.mxu0 %v666
  %900 = vmatpush1.bf16.msra.mxu0 %v665
  %901 = vmatprep.subr.bf16.mxu0 %v668
  %902 = vmatpush1.bf16.msra.mxu0 %v667
  %903 = vmatprep.subr.bf16.mxu0 %v670
  %904 = vmatpush1.bf16.msra.mxu0 %v669
  %905 = vmatprep.subr.bf16.mxu0 %v672
  %906 = vmatpush1.bf16.msra.mxu0 %v671
  %907 = vmatprep.subr.bf16.mxu0 %v674
  %908 = vmatpush1.bf16.msra.mxu0 %v673
  %909 = vmatprep.subr.bf16.mxu0 %v676
  %910 = vmatpush1.bf16.msra.mxu0 %v675
  %911 = vmatprep.subr.bf16.mxu0 %v678
  %912 = vmatpush1.bf16.msra.mxu0 %v677
  %913 = vmatprep.subr.bf16.mxu0 %v680
  %914 = vmatpush1.bf16.msra.mxu0 %v679
  %915 = vmatprep.subr.bf16.mxu0 %v682
  %916 = vmatpush1.bf16.msra.mxu0 %v681
  %917 = vmatprep.subr.bf16.mxu0 %v684
  %918 = vmatpush1.bf16.msra.mxu0 %v683
  %919 = vmatprep.subr.bf16.mxu0 %v686
  %920 = vmatpush1.bf16.msra.mxu0 %v685
  %921 = vmatprep.subr.bf16.mxu0 %v688
  %922 = vmatpush1.bf16.msra.mxu0 %v687
  %923 = vmatprep.mubr.bf16.mxu0 %v286
  %924 = vmatmul.mubr.bf16.gmra.mrb[0].mxu0 %v285
  %v925 = vpop.f32.mrb[0].mxu0
  %v926 = vadd.f32 %v873, %v925
  %v927 = vpop.f32.mrb[0].mxu0
  %v928 = vadd.f32 %v875, %v927
  %v929 = vpop.f32.mrb[0].mxu0
  %v930 = vadd.f32 %v877, %v929
  %v931 = vpop.f32.mrb[0].mxu0
  %v932 = vadd.f32 %v879, %v931
  %933 = vmatprep.mubr.bf16.mxu0 %v292
  %934 = vmatmul.mubr.bf16.gmra.mrb[0].mxu0 %v291
  %v935 = vpop.f32.mrb[0].mxu0
  %v936 = vadd.f32 %v883, %v935
  %v937 = vpop.f32.mrb[0].mxu0
  %v938 = vadd.f32 %v885, %v937
  %v939 = vpop.f32.mrb[0].mxu0
  %v940 = vadd.f32 %v887, %v939
  %v941 = vpop.f32.mrb[0].mxu0
  %v942 = vadd.f32 %v889, %v941
  %943 = vdwg.mxu0
  %v956 = vunpack.c.l.b16 %v29
  %v957 = vunpack.c.h.b16 %v29
  %v958 = vunpack.c.l.b16 %v30
  %v959 = vunpack.c.h.b16 %v30
  %v960 = vunpack.c.l.b16 %v31
  %v961 = vunpack.c.h.b16 %v31
  %v962 = vunpack.c.l.b16 %v32
  %v963 = vunpack.c.h.b16 %v32
  %v964 = vunpack.c.l.b16 %v33
  %v965 = vunpack.c.h.b16 %v33
  %v966 = vunpack.c.l.b16 %v34
  %v967 = vunpack.c.h.b16 %v34
  %v968 = vunpack.c.l.b16 %v35
  %v969 = vunpack.c.h.b16 %v35
  %v970 = vunpack.c.l.b16 %v36
  %v971 = vunpack.c.h.b16 %v36
  %v972 = vunpack.c.l.b16 %v37
  %v973 = vunpack.c.h.b16 %v37
  %v974 = vunpack.c.l.b16 %v38
  %v975 = vunpack.c.h.b16 %v38
  %v976 = vunpack.c.l.b16 %v39
  %v977 = vunpack.c.h.b16 %v39
  %v978 = vunpack.c.l.b16 %v40
  %v979 = vunpack.c.h.b16 %v40
  %v980 = vpack.c.b16 %v962, %v956
  %v981 = vpack.c.b16 %v963, %v957
  %v982 = vpack.c.b16 %v964, %v958
  %v983 = vpack.c.b16 %v965, %v959
  %v984 = vpack.c.b16 %v966, %v960
  %v985 = vpack.c.b16 %v967, %v961
  %v986 = vpack.c.b16 %v974, %v968
  %v987 = vpack.c.b16 %v975, %v969
  %v988 = vpack.c.b16 %v976, %v970
  %v989 = vpack.c.b16 %v977, %v971
  %v990 = vpack.c.b16 %v978, %v972
  %v991 = vpack.c.b16 %v979, %v973
  %v1100 = vunpack.c.l.b16 %v41
  %v1101 = vunpack.c.h.b16 %v41
  %v1102 = vunpack.c.l.b16 %v42
  %v1103 = vunpack.c.h.b16 %v42
  %v1104 = vunpack.c.l.b16 %v43
  %v1105 = vunpack.c.h.b16 %v43
  %v1106 = vunpack.c.l.b16 %v44
  %v1107 = vunpack.c.h.b16 %v44
  %v1108 = vunpack.c.l.b16 %v45
  %v1109 = vunpack.c.h.b16 %v45
  %v1110 = vunpack.c.l.b16 %v46
  %v1111 = vunpack.c.h.b16 %v46
  %v1112 = vunpack.c.l.b16 %v47
  %v1113 = vunpack.c.h.b16 %v47
  %v1114 = vunpack.c.l.b16 %v48
  %v1115 = vunpack.c.h.b16 %v48
  %v1116 = vunpack.c.l.b16 %v49
  %v1117 = vunpack.c.h.b16 %v49
  %v1118 = vunpack.c.l.b16 %v50
  %v1119 = vunpack.c.h.b16 %v50
  %v1120 = vunpack.c.l.b16 %v51
  %v1121 = vunpack.c.h.b16 %v51
  %v1122 = vunpack.c.l.b16 %v52
  %v1123 = vunpack.c.h.b16 %v52
  %v1124 = vunpack.c.l.b16 %v53
  %v1125 = vunpack.c.h.b16 %v53
  %v1126 = vunpack.c.l.b16 %v54
  %v1127 = vunpack.c.h.b16 %v54
  %v1128 = vunpack.c.l.b16 %v55
  %v1129 = vunpack.c.h.b16 %v55
  %v1130 = vunpack.c.l.b16 %v56
  %v1131 = vunpack.c.h.b16 %v56
  %v1132 = vunpack.c.l.b16 %v57
  %v1133 = vunpack.c.h.b16 %v57
  %v1134 = vunpack.c.l.b16 %v58
  %v1135 = vunpack.c.h.b16 %v58
  %v1136 = vunpack.c.l.b16 %v59
  %v1137 = vunpack.c.h.b16 %v59
  %v1138 = vunpack.c.l.b16 %v60
  %v1139 = vunpack.c.h.b16 %v60
  %v1140 = vunpack.c.l.b16 %v61
  %v1141 = vunpack.c.h.b16 %v61
  %v1142 = vunpack.c.l.b16 %v62
  %v1143 = vunpack.c.h.b16 %v62
  %v1144 = vunpack.c.l.b16 %v63
  %v1145 = vunpack.c.h.b16 %v63
  %v1146 = vunpack.c.l.b16 %v64
  %v1147 = vunpack.c.h.b16 %v64
  %v1148 = vunpack.c.l.b16 %v65
  %v1149 = vunpack.c.h.b16 %v65
  %v1150 = vunpack.c.l.b16 %v66
  %v1151 = vunpack.c.h.b16 %v66
  %v1152 = vunpack.c.l.b16 %v67
  %v1153 = vunpack.c.h.b16 %v67
  %v1154 = vunpack.c.l.b16 %v68
  %v1155 = vunpack.c.h.b16 %v68
  %v1156 = vunpack.c.l.b16 %v69
  %v1157 = vunpack.c.h.b16 %v69
  %v1158 = vunpack.c.l.b16 %v70
  %v1159 = vunpack.c.h.b16 %v70
  %v1160 = vunpack.c.l.b16 %v71
  %v1161 = vunpack.c.h.b16 %v71
  %v1162 = vunpack.c.l.b16 %v72
  %v1163 = vunpack.c.h.b16 %v72
  %v1164 = vunpack.c.l.b16 %v73
  %v1165 = vunpack.c.h.b16 %v73
  %v1166 = vunpack.c.l.b16 %v74
  %v1167 = vunpack.c.h.b16 %v74
  %v1168 = vunpack.c.l.b16 %v75
  %v1169 = vunpack.c.h.b16 %v75
  %v1170 = vunpack.c.l.b16 %v76
  %v1171 = vunpack.c.h.b16 %v76
  %v1172 = vunpack.c.l.b16 %v77
  %v1173 = vunpack.c.h.b16 %v77
  %v1174 = vunpack.c.l.b16 %v78
  %v1175 = vunpack.c.h.b16 %v78
  %v1176 = vunpack.c.l.b16 %v79
  %v1177 = vunpack.c.h.b16 %v79
  %v1178 = vunpack.c.l.b16 %v80
  %v1179 = vunpack.c.h.b16 %v80
  %v1180 = vunpack.c.l.b16 %v81
  %v1181 = vunpack.c.h.b16 %v81
  %v1182 = vunpack.c.l.b16 %v82
  %v1183 = vunpack.c.h.b16 %v82
  %v1184 = vunpack.c.l.b16 %v83
  %v1185 = vunpack.c.h.b16 %v83
  %v1186 = vunpack.c.l.b16 %v84
  %v1187 = vunpack.c.h.b16 %v84
  %v1188 = vunpack.c.l.b16 %v85
  %v1189 = vunpack.c.h.b16 %v85
  %v1190 = vunpack.c.l.b16 %v86
  %v1191 = vunpack.c.h.b16 %v86
  %v1192 = vunpack.c.l.b16 %v87
  %v1193 = vunpack.c.h.b16 %v87
  %v1194 = vunpack.c.l.b16 %v88
  %v1195 = vunpack.c.h.b16 %v88
  %v1196 = vunpack.c.l.b16 %v89
  %v1197 = vunpack.c.h.b16 %v89
  %v1198 = vunpack.c.l.b16 %v90
  %v1199 = vunpack.c.h.b16 %v90
  %v1200 = vunpack.c.l.b16 %v91
  %v1201 = vunpack.c.h.b16 %v91
  %v1202 = vunpack.c.l.b16 %v92
  %v1203 = vunpack.c.h.b16 %v92
  %v1204 = vunpack.c.l.b16 %v93
  %v1205 = vunpack.c.h.b16 %v93
  %v1206 = vunpack.c.l.b16 %v94
  %v1207 = vunpack.c.h.b16 %v94
  %v1208 = vunpack.c.l.b16 %v95
  %v1209 = vunpack.c.h.b16 %v95
  %v1210 = vunpack.c.l.b16 %v96
  %v1211 = vunpack.c.h.b16 %v96
  %v1212 = vunpack.c.l.b16 %v97
  %v1213 = vunpack.c.h.b16 %v97
  %v1214 = vunpack.c.l.b16 %v98
  %v1215 = vunpack.c.h.b16 %v98
  %v1216 = vunpack.c.l.b16 %v99
  %v1217 = vunpack.c.h.b16 %v99
  %v1218 = vunpack.c.l.b16 %v100
  %v1219 = vunpack.c.h.b16 %v100
  %v1220 = vunpack.c.l.b16 %v101
  %v1221 = vunpack.c.h.b16 %v101
  %v1222 = vunpack.c.l.b16 %v102
  %v1223 = vunpack.c.h.b16 %v102
  %v1224 = vunpack.c.l.b16 %v103
  %v1225 = vunpack.c.h.b16 %v103
  %v1226 = vunpack.c.l.b16 %v104
  %v1227 = vunpack.c.h.b16 %v104
  %v1228 = vunpack.c.l.b16 %v105
  %v1229 = vunpack.c.h.b16 %v105
  %v1230 = vunpack.c.l.b16 %v106
  %v1231 = vunpack.c.h.b16 %v106
  %v1232 = vunpack.c.l.b16 %v107
  %v1233 = vunpack.c.h.b16 %v107
  %v1234 = vunpack.c.l.b16 %v108
  %v1235 = vunpack.c.h.b16 %v108
  %v1236 = vunpack.c.l.b16 %v109
  %v1237 = vunpack.c.h.b16 %v109
  %v1238 = vunpack.c.l.b16 %v110
  %v1239 = vunpack.c.h.b16 %v110
  %v1240 = vunpack.c.l.b16 %v111
  %v1241 = vunpack.c.h.b16 %v111
  %v1242 = vunpack.c.l.b16 %v112
  %v1243 = vunpack.c.h.b16 %v112
  %v1244 = vunpack.c.l.b16 %v113
  %v1245 = vunpack.c.h.b16 %v113
  %v1246 = vunpack.c.l.b16 %v114
  %v1247 = vunpack.c.h.b16 %v114
  %v1248 = vunpack.c.l.b16 %v115
  %v1249 = vunpack.c.h.b16 %v115
  %v1250 = vunpack.c.l.b16 %v116
  %v1251 = vunpack.c.h.b16 %v116
  %v1252 = vunpack.c.l.b16 %v117
  %v1253 = vunpack.c.h.b16 %v117
  %v1254 = vunpack.c.l.b16 %v118
  %v1255 = vunpack.c.h.b16 %v118
  %v1256 = vunpack.c.l.b16 %v119
  %v1257 = vunpack.c.h.b16 %v119
  %v1258 = vunpack.c.l.b16 %v120
  %v1259 = vunpack.c.h.b16 %v120
  %v1260 = vunpack.c.l.b16 %v121
  %v1261 = vunpack.c.h.b16 %v121
  %v1262 = vunpack.c.l.b16 %v122
  %v1263 = vunpack.c.h.b16 %v122
  %v1264 = vunpack.c.l.b16 %v123
  %v1265 = vunpack.c.h.b16 %v123
  %v1266 = vunpack.c.l.b16 %v124
  %v1267 = vunpack.c.h.b16 %v124
  %v1268 = vunpack.c.l.b16 %v125
  %v1269 = vunpack.c.h.b16 %v125
  %v1270 = vunpack.c.l.b16 %v126
  %v1271 = vunpack.c.h.b16 %v126
  %v1272 = vunpack.c.l.b16 %v127
  %v1273 = vunpack.c.h.b16 %v127
  %v1274 = vunpack.c.l.b16 %v128
  %v1275 = vunpack.c.h.b16 %v128
  %v1276 = vunpack.c.l.b16 %v129
  %v1277 = vunpack.c.h.b16 %v129
  %v1278 = vunpack.c.l.b16 %v130
  %v1279 = vunpack.c.h.b16 %v130
  %v1280 = vunpack.c.l.b16 %v131
  %v1281 = vunpack.c.h.b16 %v131
  %v1282 = vunpack.c.l.b16 %v132
  %v1283 = vunpack.c.h.b16 %v132
  %v1284 = vunpack.c.l.b16 %v133
  %v1285 = vunpack.c.h.b16 %v133
  %v1286 = vunpack.c.l.b16 %v134
  %v1287 = vunpack.c.h.b16 %v134
  %v1288 = vunpack.c.l.b16 %v135
  %v1289 = vunpack.c.h.b16 %v135
  %v1290 = vunpack.c.l.b16 %v136
  %v1291 = vunpack.c.h.b16 %v136
  %v1292 = vpack.c.b16 %v1102, %v1100
  %v1293 = vpack.c.b16 %v1103, %v1101
  %v1294 = vpack.c.b16 %v1106, %v1104
  %v1295 = vpack.c.b16 %v1107, %v1105
  %v1296 = vpack.c.b16 %v1110, %v1108
  %v1297 = vpack.c.b16 %v1111, %v1109
  %v1298 = vpack.c.b16 %v1114, %v1112
  %v1299 = vpack.c.b16 %v1115, %v1113
  %v1300 = vpack.c.b16 %v1118, %v1116
  %v1301 = vpack.c.b16 %v1119, %v1117
  %v1302 = vpack.c.b16 %v1122, %v1120
  %v1303 = vpack.c.b16 %v1123, %v1121
  %v1304 = vpack.c.b16 %v1126, %v1124
  %v1305 = vpack.c.b16 %v1127, %v1125
  %v1306 = vpack.c.b16 %v1130, %v1128
  %v1307 = vpack.c.b16 %v1131, %v1129
  %v1308 = vpack.c.b16 %v1134, %v1132
  %v1309 = vpack.c.b16 %v1135, %v1133
  %v1310 = vpack.c.b16 %v1138, %v1136
  %v1311 = vpack.c.b16 %v1139, %v1137
  %v1312 = vpack.c.b16 %v1142, %v1140
  %v1313 = vpack.c.b16 %v1143, %v1141
  %v1314 = vpack.c.b16 %v1146, %v1144
  %v1315 = vpack.c.b16 %v1147, %v1145
  %v1316 = vpack.c.b16 %v1150, %v1148
  %v1317 = vpack.c.b16 %v1151, %v1149
  %v1318 = vpack.c.b16 %v1154, %v1152
  %v1319 = vpack.c.b16 %v1155, %v1153
  %v1320 = vpack.c.b16 %v1158, %v1156
  %v1321 = vpack.c.b16 %v1159, %v1157
  %v1322 = vpack.c.b16 %v1162, %v1160
  %v1323 = vpack.c.b16 %v1163, %v1161
  %v1324 = vpack.c.b16 %v1166, %v1164
  %v1325 = vpack.c.b16 %v1167, %v1165
  %v1326 = vpack.c.b16 %v1170, %v1168
  %v1327 = vpack.c.b16 %v1171, %v1169
  %v1328 = vpack.c.b16 %v1174, %v1172
  %v1329 = vpack.c.b16 %v1175, %v1173
  %v1330 = vpack.c.b16 %v1178, %v1176
  %v1331 = vpack.c.b16 %v1179, %v1177
  %v1332 = vpack.c.b16 %v1182, %v1180
  %v1333 = vpack.c.b16 %v1183, %v1181
  %v1334 = vpack.c.b16 %v1186, %v1184
  %v1335 = vpack.c.b16 %v1187, %v1185
  %v1336 = vpack.c.b16 %v1190, %v1188
  %v1337 = vpack.c.b16 %v1191, %v1189
  %v1338 = vpack.c.b16 %v1194, %v1192
  %v1339 = vpack.c.b16 %v1195, %v1193
  %v1340 = vpack.c.b16 %v1198, %v1196
  %v1341 = vpack.c.b16 %v1199, %v1197
  %v1342 = vpack.c.b16 %v1202, %v1200
  %v1343 = vpack.c.b16 %v1203, %v1201
  %v1344 = vpack.c.b16 %v1206, %v1204
  %v1345 = vpack.c.b16 %v1207, %v1205
  %v1346 = vpack.c.b16 %v1210, %v1208
  %v1347 = vpack.c.b16 %v1211, %v1209
  %v1348 = vpack.c.b16 %v1214, %v1212
  %v1349 = vpack.c.b16 %v1215, %v1213
  %v1350 = vpack.c.b16 %v1218, %v1216
  %v1351 = vpack.c.b16 %v1219, %v1217
  %v1352 = vpack.c.b16 %v1222, %v1220
  %v1353 = vpack.c.b16 %v1223, %v1221
  %v1354 = vpack.c.b16 %v1226, %v1224
  %v1355 = vpack.c.b16 %v1227, %v1225
  %v1356 = vpack.c.b16 %v1230, %v1228
  %v1357 = vpack.c.b16 %v1231, %v1229
  %v1358 = vpack.c.b16 %v1234, %v1232
  %v1359 = vpack.c.b16 %v1235, %v1233
  %v1360 = vpack.c.b16 %v1238, %v1236
  %v1361 = vpack.c.b16 %v1239, %v1237
  %v1362 = vpack.c.b16 %v1242, %v1240
  %v1363 = vpack.c.b16 %v1243, %v1241
  %v1364 = vpack.c.b16 %v1246, %v1244
  %v1365 = vpack.c.b16 %v1247, %v1245
  %v1366 = vpack.c.b16 %v1250, %v1248
  %v1367 = vpack.c.b16 %v1251, %v1249
  %v1368 = vpack.c.b16 %v1254, %v1252
  %v1369 = vpack.c.b16 %v1255, %v1253
  %v1370 = vpack.c.b16 %v1258, %v1256
  %v1371 = vpack.c.b16 %v1259, %v1257
  %v1372 = vpack.c.b16 %v1262, %v1260
  %v1373 = vpack.c.b16 %v1263, %v1261
  %v1374 = vpack.c.b16 %v1266, %v1264
  %v1375 = vpack.c.b16 %v1267, %v1265
  %v1376 = vpack.c.b16 %v1270, %v1268
  %v1377 = vpack.c.b16 %v1271, %v1269
  %v1378 = vpack.c.b16 %v1274, %v1272
  %v1379 = vpack.c.b16 %v1275, %v1273
  %v1380 = vpack.c.b16 %v1278, %v1276
  %v1381 = vpack.c.b16 %v1279, %v1277
  %v1382 = vpack.c.b16 %v1282, %v1280
  %v1383 = vpack.c.b16 %v1283, %v1281
  %v1384 = vpack.c.b16 %v1286, %v1284
  %v1385 = vpack.c.b16 %v1287, %v1285
  %v1386 = vpack.c.b16 %v1290, %v1288
  %v1387 = vpack.c.b16 %v1291, %v1289
  %1484 = vmatprep.subr.bf16.mxu0 %v1293
  %1485 = vmatpush1.bf16.msra.mxu0 %v1292
  %1486 = vmatprep.subr.bf16.mxu0 %v1295
  %1487 = vmatpush1.bf16.msra.mxu0 %v1294
  %1488 = vmatprep.subr.bf16.mxu0 %v1297
  %1489 = vmatpush1.bf16.msra.mxu0 %v1296
  %1490 = vmatprep.subr.bf16.mxu0 %v1299
  %1491 = vmatpush1.bf16.msra.mxu0 %v1298
  %1492 = vmatprep.subr.bf16.mxu0 %v1301
  %1493 = vmatpush1.bf16.msra.mxu0 %v1300
  %1494 = vmatprep.subr.bf16.mxu0 %v1303
  %1495 = vmatpush1.bf16.msra.mxu0 %v1302
  %1496 = vmatprep.subr.bf16.mxu0 %v1305
  %1497 = vmatpush1.bf16.msra.mxu0 %v1304
  %1498 = vmatprep.subr.bf16.mxu0 %v1307
  %1499 = vmatpush1.bf16.msra.mxu0 %v1306
  %1500 = vmatprep.subr.bf16.mxu0 %v1309
  %1501 = vmatpush1.bf16.msra.mxu0 %v1308
  %1502 = vmatprep.subr.bf16.mxu0 %v1311
  %1503 = vmatpush1.bf16.msra.mxu0 %v1310
  %1504 = vmatprep.subr.bf16.mxu0 %v1313
  %1505 = vmatpush1.bf16.msra.mxu0 %v1312
  %1506 = vmatprep.subr.bf16.mxu0 %v1315
  %1507 = vmatpush1.bf16.msra.mxu0 %v1314
  %1508 = vmatprep.subr.bf16.mxu0 %v1317
  %1509 = vmatpush1.bf16.msra.mxu0 %v1316
  %1510 = vmatprep.subr.bf16.mxu0 %v1319
  %1511 = vmatpush1.bf16.msra.mxu0 %v1318
  %1512 = vmatprep.subr.bf16.mxu0 %v1321
  %1513 = vmatpush1.bf16.msra.mxu0 %v1320
  %1514 = vmatprep.subr.bf16.mxu0 %v1323
  %1515 = vmatpush1.bf16.msra.mxu0 %v1322
  %1516 = vmatprep.mubr.bf16.mxu0 %v981
  %1517 = vmatmul.mubr.bf16.gmra.mrb[0].mxu0 %v980
  %v1518 = vpop.f32.mrb[0].mxu0
  %v1519 = vadd.f32 %v926, %v1518
  %v1520 = vpop.f32.mrb[0].mxu0
  %v1521 = vadd.f32 %v928, %v1520
  %v1522 = vpop.f32.mrb[0].mxu0
  %v1523 = vadd.f32 %v930, %v1522
  %v1524 = vpop.f32.mrb[0].mxu0
  %v1525 = vadd.f32 %v932, %v1524
  %1526 = vmatprep.mubr.bf16.mxu0 %v987
  %1527 = vmatmul.mubr.bf16.gmra.mrb[0].mxu0 %v986
  %v1528 = vpop.f32.mrb[0].mxu0
  %v1529 = vadd.f32 %v936, %v1528
  %v1530 = vpop.f32.mrb[0].mxu0
  %v1531 = vadd.f32 %v938, %v1530
  %v1532 = vpop.f32.mrb[0].mxu0
  %v1533 = vadd.f32 %v940, %v1532
  %v1534 = vpop.f32.mrb[0].mxu0
  %v1535 = vadd.f32 %v942, %v1534
  %1536 = vdwg.mxu0
  %1537 = vmatprep.subr.bf16.mxu0 %v1325
  %1538 = vmatpush1.bf16.msra.mxu0 %v1324
  %1539 = vmatprep.subr.bf16.mxu0 %v1327
  %1540 = vmatpush1.bf16.msra.mxu0 %v1326
  %1541 = vmatprep.subr.bf16.mxu0 %v1329
  %1542 = vmatpush1.bf16.msra.mxu0 %v1328
  %1543 = vmatprep.subr.bf16.mxu0 %v1331
  %1544 = vmatpush1.bf16.msra.mxu0 %v1330
  %1545 = vmatprep.subr.bf16.mxu0 %v1333
  %1546 = vmatpush1.bf16.msra.mxu0 %v1332
  %1547 = vmatprep.subr.bf16.mxu0 %v1335
  %1548 = vmatpush1.bf16.msra.mxu0 %v1334
  %1549 = vmatprep.subr.bf16.mxu0 %v1337
  %1550 = vmatpush1.bf16.msra.mxu0 %v1336
  %1551 = vmatprep.subr.bf16.mxu0 %v1339
  %1552 = vmatpush1.bf16.msra.mxu0 %v1338
  %1553 = vmatprep.subr.bf16.mxu0 %v1341
  %1554 = vmatpush1.bf16.msra.mxu0 %v1340
  %1555 = vmatprep.subr.bf16.mxu0 %v1343
  %1556 = vmatpush1.bf16.msra.mxu0 %v1342
  %1557 = vmatprep.subr.bf16.mxu0 %v1345
  %1558 = vmatpush1.bf16.msra.mxu0 %v1344
  %1559 = vmatprep.subr.bf16.mxu0 %v1347
  %1560 = vmatpush1.bf16.msra.mxu0 %v1346
  %1561 = vmatprep.subr.bf16.mxu0 %v1349
  %1562 = vmatpush1.bf16.msra.mxu0 %v1348
  %1563 = vmatprep.subr.bf16.mxu0 %v1351
  %1564 = vmatpush1.bf16.msra.mxu0 %v1350
  %1565 = vmatprep.subr.bf16.mxu0 %v1353
  %1566 = vmatpush1.bf16.msra.mxu0 %v1352
  %1567 = vmatprep.subr.bf16.mxu0 %v1355
  %1568 = vmatpush1.bf16.msra.mxu0 %v1354
  %1569 = vmatprep.mubr.bf16.mxu0 %v983
  %1570 = vmatmul.mubr.bf16.gmra.mrb[0].mxu0 %v982
  %v1571 = vpop.f32.mrb[0].mxu0
  %v1572 = vadd.f32 %v1519, %v1571
  %v1573 = vpop.f32.mrb[0].mxu0
  %v1574 = vadd.f32 %v1521, %v1573
  %v1575 = vpop.f32.mrb[0].mxu0
  %v1576 = vadd.f32 %v1523, %v1575
  %v1577 = vpop.f32.mrb[0].mxu0
  %v1578 = vadd.f32 %v1525, %v1577
  %1579 = vmatprep.mubr.bf16.mxu0 %v989
  %1580 = vmatmul.mubr.bf16.gmra.mrb[0].mxu0 %v988
  %v1581 = vpop.f32.mrb[0].mxu0
  %v1582 = vadd.f32 %v1529, %v1581
  %v1583 = vpop.f32.mrb[0].mxu0
  %v1584 = vadd.f32 %v1531, %v1583
  %v1585 = vpop.f32.mrb[0].mxu0
  %v1586 = vadd.f32 %v1533, %v1585
  %v1587 = vpop.f32.mrb[0].mxu0
  %v1588 = vadd.f32 %v1535, %v1587
  %1589 = vdwg.mxu0
  %1590 = vmatprep.subr.bf16.mxu0 %v1357
  %1591 = vmatpush1.bf16.msra.mxu0 %v1356
  %1592 = vmatprep.subr.bf16.mxu0 %v1359
  %1593 = vmatpush1.bf16.msra.mxu0 %v1358
  %1594 = vmatprep.subr.bf16.mxu0 %v1361
  %1595 = vmatpush1.bf16.msra.mxu0 %v1360
  %1596 = vmatprep.subr.bf16.mxu0 %v1363
  %1597 = vmatpush1.bf16.msra.mxu0 %v1362
  %1598 = vmatprep.subr.bf16.mxu0 %v1365
  %1599 = vmatpush1.bf16.msra.mxu0 %v1364
  %1600 = vmatprep.subr.bf16.mxu0 %v1367
  %1601 = vmatpush1.bf16.msra.mxu0 %v1366
  %1602 = vmatprep.subr.bf16.mxu0 %v1369
  %1603 = vmatpush1.bf16.msra.mxu0 %v1368
  %1604 = vmatprep.subr.bf16.mxu0 %v1371
  %1605 = vmatpush1.bf16.msra.mxu0 %v1370
  %1606 = vmatprep.subr.bf16.mxu0 %v1373
  %1607 = vmatpush1.bf16.msra.mxu0 %v1372
  %1608 = vmatprep.subr.bf16.mxu0 %v1375
  %1609 = vmatpush1.bf16.msra.mxu0 %v1374
  %1610 = vmatprep.subr.bf16.mxu0 %v1377
  %1611 = vmatpush1.bf16.msra.mxu0 %v1376
  %1612 = vmatprep.subr.bf16.mxu0 %v1379
  %1613 = vmatpush1.bf16.msra.mxu0 %v1378
  %1614 = vmatprep.subr.bf16.mxu0 %v1381
  %1615 = vmatpush1.bf16.msra.mxu0 %v1380
  %1616 = vmatprep.subr.bf16.mxu0 %v1383
  %1617 = vmatpush1.bf16.msra.mxu0 %v1382
  %1618 = vmatprep.subr.bf16.mxu0 %v1385
  %1619 = vmatpush1.bf16.msra.mxu0 %v1384
  %1620 = vmatprep.subr.bf16.mxu0 %v1387
  %1621 = vmatpush1.bf16.msra.mxu0 %v1386
  %1622 = vmatprep.mubr.bf16.mxu0 %v985
  %1623 = vmatmul.mubr.bf16.gmra.mrb[0].mxu0 %v984
  %v1624 = vpop.f32.mrb[0].mxu0
  %v1625 = vadd.f32 %v1572, %v1624
  %v1626 = vpop.f32.mrb[0].mxu0
  %v1627 = vadd.f32 %v1574, %v1626
  %v1628 = vpop.f32.mrb[0].mxu0
  %v1629 = vadd.f32 %v1576, %v1628
  %v1630 = vpop.f32.mrb[0].mxu0
  %v1631 = vadd.f32 %v1578, %v1630
  %1632 = vmatprep.mubr.bf16.mxu0 %v991
  %1633 = vmatmul.mubr.bf16.gmra.mrb[0].mxu0 %v990
  %v1634 = vpop.f32.mrb[0].mxu0
  %v1635 = vadd.f32 %v1582, %v1634
  %v1636 = vpop.f32.mrb[0].mxu0
  %v1637 = vadd.f32 %v1584, %v1636
  %v1638 = vpop.f32.mrb[0].mxu0
  %v1639 = vadd.f32 %v1586, %v1638
  %v1640 = vpop.f32.mrb[0].mxu0
  %v1641 = vadd.f32 %v1588, %v1640
  %1642 = vdwg.mxu0
  %v1643 = vpack.c.bf16 %v1629, %v1625
  %v1644 = vpack.c.bf16 %v1631, %v1627
  %v1645 = vpack.c.bf16 %v1639, %v1635
  %v1646 = vpack.c.bf16 %v1641, %v1637
  %v1651 = vunpack.c.l.b16 %v1643
  %v1652 = vunpack.c.l.b16 %v1644
  %v1653 = vunpack.c.h.b16 %v1643
  %v1654 = vunpack.c.h.b16 %v1644
  %v1655 = vunpack.c.l.b16 %v1645
  %v1656 = vunpack.c.l.b16 %v1646
  %v1657 = vunpack.c.h.b16 %v1645
  %v1658 = vunpack.c.h.b16 %v1646
  %v1659 = vpack.c.b16 %v1652, %v1651
  %v1660 = vpack.c.b16 %v1654, %v1653
  %v1661 = vpack.c.b16 %v1656, %v1655
  %v1662 = vpack.c.b16 %v1658, %v1657
  %1667 = vst [vmem:[%s8] sm:$0xff] %v1659
  %1668 = vst [vmem:[%s8 + $0x8] sm:$0xff] %v1660
  %1669 = vst [vmem:[%s8 + $0x10] sm:$0xff] %v1661
  %1670 = vst [vmem:[%s8 + $0x18] sm:$0xff] %v1662
  %v1671 = vld [vmem:[%s6] sm:$0xff]
  %v1672 = vld [vmem:[%s6 + $0x8] sm:$0xff]
  %v1673 = vlaneseq
  %v1674 = vshrl.u32 %v1673, 7
  %v1675 = vsub.s32 0, %v1674
  %v1676 = vrot.slane %v1671, %v1675
  %v1677 = vlaneseq
  %v1678 = vshrl.u32 %v1677, 7
  %v1679 = vsub.s32 0, %v1678
  %v1680 = vrot.slane %v1672, %v1679
  %v1681 = vmul.f32 %v1625, %v1676
  %v1682 = vmul.f32 %v1627, %v1680
  %v1683 = vmul.f32 %v1629, %v1676
  %v1684 = vmul.f32 %v1631, %v1680
  %v1685 = vmul.f32 %v1635, %v1676
  %v1686 = vmul.f32 %v1637, %v1680
  %v1687 = vmul.f32 %v1639, %v1676
  %v1688 = vmul.f32 %v1641, %v1680
  %v1689 = vlaneseq
  %v1690 = vshrl.u32 %v1689, 7
  %v1691 = vsub.s32 1, %v1690
  %v1692 = vrot.slane %v1671, %v1691
  %v1693 = vlaneseq
  %v1694 = vshrl.u32 %v1693, 7
  %v1695 = vsub.s32 1, %v1694
  %v1696 = vrot.slane %v1672, %v1695
  %v1697 = vadd.f32 %v1681, %v1692
  %v1698 = vadd.f32 %v1682, %v1696
  %v1699 = vadd.f32 %v1683, %v1692
  %v1700 = vadd.f32 %v1684, %v1696
  %v1701 = vadd.f32 %v1685, %v1692
  %v1702 = vadd.f32 %v1686, %v1696
  %v1703 = vadd.f32 %v1687, %v1692
  %v1704 = vadd.f32 %v1688, %v1696
  %v1705 = vmax.f32 %v1697, 0.0
  %v1706 = vmax.f32 %v1698, 0.0
  %v1707 = vmax.f32 %v1699, 0.0
  %v1708 = vmax.f32 %v1700, 0.0
  %v1709 = vmax.f32 %v1701, 0.0
  %v1710 = vmax.f32 %v1702, 0.0
  %v1711 = vmax.f32 %v1703, 0.0
  %v1712 = vmax.f32 %v1704, 0.0
  %v1713 = vpack.c.bf16 %v1707, %v1705
  %v1714 = vpack.c.bf16 %v1708, %v1706
  %v1715 = vpack.c.bf16 %v1711, %v1709
  %v1716 = vpack.c.bf16 %v1712, %v1710
  %v1717 = vld [vmem:[%s4] sm:$0xf]
  %v1718 = vld [vmem:[%s4 + $0x4] sm:$0xf]
  %v1719 = vld [vmem:[%s4 + $0x8] sm:$0xf]
  %v1720 = vld [vmem:[%s4 + $0xc] sm:$0xf]
  %v1721 = vld [vmem:[%s4 + $0x10] sm:$0xf]
  %v1722 = vld [vmem:[%s4 + $0x14] sm:$0xf]
  %v1723 = vld [vmem:[%s4 + $0x18] sm:$0xf]
  %v1724 = vld [vmem:[%s4 + $0x1c] sm:$0xf]
  %v1725 = vld [vmem:[%s4 + $0x20] sm:$0xf]
  %v1726 = vld [vmem:[%s4 + $0x24] sm:$0xf]
  %v1727 = vld [vmem:[%s4 + $0x28] sm:$0xf]
  %v1728 = vld [vmem:[%s4 + $0x2c] sm:$0xf]
  %v1729 = vld [vmem:[%s4 + $0x30] sm:$0xf]
  %v1730 = vld [vmem:[%s4 + $0x34] sm:$0xf]
  %v1731 = vld [vmem:[%s4 + $0x38] sm:$0xf]
  %v1732 = vld [vmem:[%s4 + $0x3c] sm:$0xf]
  %v1733 = vld [vmem:[%s4 + $0x40] sm:$0xf]
  %v1734 = vld [vmem:[%s4 + $0x44] sm:$0xf]
  %v1735 = vld [vmem:[%s4 + $0x48] sm:$0xf]
  %v1736 = vld [vmem:[%s4 + $0x4c] sm:$0xf]
  %v1737 = vld [vmem:[%s4 + $0x50] sm:$0xf]
  %v1738 = vld [vmem:[%s4 + $0x54] sm:$0xf]
  %v1739 = vld [vmem:[%s4 + $0x58] sm:$0xf]
  %v1740 = vld [vmem:[%s4 + $0x5c] sm:$0xf]
  %v1741 = vld [vmem:[%s4 + $0x60] sm:$0xf]
  %v1742 = vld [vmem:[%s4 + $0x64] sm:$0xf]
  %v1743 = vld [vmem:[%s4 + $0x68] sm:$0xf]
  %v1744 = vld [vmem:[%s4 + $0x6c] sm:$0xf]
  %v1745 = vld [vmem:[%s4 + $0x70] sm:$0xf]
  %v1746 = vld [vmem:[%s4 + $0x74] sm:$0xf]
  %v1747 = vld [vmem:[%s4 + $0x78] sm:$0xf]
  %v1748 = vld [vmem:[%s4 + $0x7c] sm:$0xf]
  %v1749 = vlaneseq
  %v1750 = vshrl.u32 %v1749, 7
  %v1751 = vsub.s32 2, %v1750
  %v1752 = vrot.slane %v1671, %v1751
  %v1785 = vunpack.c.l.b16 %v1717
  %v1786 = vunpack.c.l.b16 %v1718
  %v1787 = vunpack.c.l.b16 %v1719
  %v1788 = vunpack.c.l.b16 %v1720
  %v1789 = vunpack.c.l.b16 %v1721
  %v1790 = vunpack.c.l.b16 %v1722
  %v1791 = vunpack.c.l.b16 %v1723
  %v1792 = vunpack.c.l.b16 %v1724
  %v1793 = vunpack.c.l.b16 %v1725
  %v1794 = vunpack.c.l.b16 %v1726
  %v1795 = vunpack.c.l.b16 %v1727
  %v1796 = vunpack.c.l.b16 %v1728
  %v1797 = vunpack.c.l.b16 %v1729
  %v1798 = vunpack.c.l.b16 %v1730
  %v1799 = vunpack.c.l.b16 %v1731
  %v1800 = vunpack.c.l.b16 %v1732
  %v1801 = vunpack.c.l.b16 %v1733
  %v1802 = vunpack.c.l.b16 %v1734
  %v1803 = vunpack.c.l.b16 %v1735
  %v1804 = vunpack.c.l.b16 %v1736
  %v1805 = vunpack.c.l.b16 %v1737
  %v1806 = vunpack.c.l.b16 %v1738
  %v1807 = vunpack.c.l.b16 %v1739
  %v1808 = vunpack.c.l.b16 %v1740
  %v1809 = vunpack.c.l.b16 %v1741
  %v1810 = vunpack.c.l.b16 %v1742
  %v1811 = vunpack.c.l.b16 %v1743
  %v1812 = vunpack.c.l.b16 %v1744
  %v1813 = vunpack.c.l.b16 %v1745
  %v1814 = vunpack.c.l.b16 %v1746
  %v1815 = vunpack.c.l.b16 %v1747
  %v1816 = vunpack.c.l.b16 %v1748
  %v1817 = vpack.c.b16 %v1786, %v1785
  %v1818 = vpack.c.b16 %v1788, %v1787
  %v1819 = vpack.c.b16 %v1790, %v1789
  %v1820 = vpack.c.b16 %v1792, %v1791
  %v1821 = vpack.c.b16 %v1794, %v1793
  %v1822 = vpack.c.b16 %v1796, %v1795
  %v1823 = vpack.c.b16 %v1798, %v1797
  %v1824 = vpack.c.b16 %v1800, %v1799
  %v1825 = vpack.c.b16 %v1802, %v1801
  %v1826 = vpack.c.b16 %v1804, %v1803
  %v1827 = vpack.c.b16 %v1806, %v1805
  %v1828 = vpack.c.b16 %v1808, %v1807
  %v1829 = vpack.c.b16 %v1810, %v1809
  %v1830 = vpack.c.b16 %v1812, %v1811
  %v1831 = vpack.c.b16 %v1814, %v1813
  %v1832 = vpack.c.b16 %v1816, %v1815
  %1849 = vmatprep.subr.bf16.mxu0 0
  %1850 = vmatpush1.bf16.msra.mxu0 %v1817
  %1851 = vmatprep.subr.bf16.mxu0 0
  %1852 = vmatpush1.bf16.msra.mxu0 %v1818
  %1853 = vmatprep.subr.bf16.mxu0 0
  %1854 = vmatpush1.bf16.msra.mxu0 %v1819
  %1855 = vmatprep.subr.bf16.mxu0 0
  %1856 = vmatpush1.bf16.msra.mxu0 %v1820
  %1857 = vmatprep.subr.bf16.mxu0 0
  %1858 = vmatpush1.bf16.msra.mxu0 %v1821
  %1859 = vmatprep.subr.bf16.mxu0 0
  %1860 = vmatpush1.bf16.msra.mxu0 %v1822
  %1861 = vmatprep.subr.bf16.mxu0 0
  %1862 = vmatpush1.bf16.msra.mxu0 %v1823
  %1863 = vmatprep.subr.bf16.mxu0 0
  %1864 = vmatpush1.bf16.msra.mxu0 %v1824
  %1865 = vmatprep.subr.bf16.mxu0 0
  %1866 = vmatpush1.bf16.msra.mxu0 %v1825
  %1867 = vmatprep.subr.bf16.mxu0 0
  %1868 = vmatpush1.bf16.msra.mxu0 %v1826
  %1869 = vmatprep.subr.bf16.mxu0 0
  %1870 = vmatpush1.bf16.msra.mxu0 %v1827
  %1871 = vmatprep.subr.bf16.mxu0 0
  %1872 = vmatpush1.bf16.msra.mxu0 %v1828
  %1873 = vmatprep.subr.bf16.mxu0 0
  %1874 = vmatpush1.bf16.msra.mxu0 %v1829
  %1875 = vmatprep.subr.bf16.mxu0 0
  %1876 = vmatpush1.bf16.msra.mxu0 %v1830
  %1877 = vmatprep.subr.bf16.mxu0 0
  %1878 = vmatpush1.bf16.msra.mxu0 %v1831
  %1879 = vmatprep.subr.bf16.mxu0 0
  %1880 = vmatpush1.bf16.msra.mxu0 %v1832
  %1881 = vmatprep.mubr.bf16.mxu0 %v1714
  %1882 = vmatmul.mubr.bf16.gmra.mrb[0].mxu0 %v1713
  %v1883 = vpop.f32.mrb[0].mxu0
  %v1884 = vadd.f32 %v1752, %v1883
  %v1885 = vpop.f32.mrb[0].mxu0
  %v1886 = vpop.f32.mrb[0].mxu0
  %v1887 = vadd.f32 %v1752, %v1886
  %v1888 = vpop.f32.mrb[0].mxu0
  %1889 = vmatprep.mubr.bf16.mxu0 %v1716
  %1890 = vmatmul.mubr.bf16.gmra.mrb[0].mxu0 %v1715
  %v1891 = vpop.f32.mrb[0].mxu0
  %v1892 = vadd.f32 %v1752, %v1891
  %v1893 = vpop.f32.mrb[0].mxu0
  %v1894 = vpop.f32.mrb[0].mxu0
  %v1895 = vadd.f32 %v1752, %v1894
  %v1896 = vpop.f32.mrb[0].mxu0
  %1897 = vdwg.mxu0
  %v1898 = vmax.f32 %v1884, 0.0
  %v1899 = vmax.f32 %v1887, 0.0
  %v1900 = vmax.f32 %v1892, 0.0
  %v1901 = vmax.f32 %v1895, 0.0
  %v1902 = vld [vmem:[%s5] sm:$0xff]
  %v1903 = vld [vmem:[%s5 + $0x8] sm:$0xff]
  %v1904 = vld [vmem:[%s5 + $0x10] sm:$0xff]
  %v1905 = vld [vmem:[%s5 + $0x18] sm:$0xff]
  %v1906 = vld [vmem:[%s5 + $0x20] sm:$0xff]
  %v1907 = vld [vmem:[%s5 + $0x28] sm:$0xff]
  %v1908 = vld [vmem:[%s5 + $0x30] sm:$0xff]
  %v1909 = vld [vmem:[%s5 + $0x38] sm:$0xff]
  %v1910 = vld [vmem:[%s5 + $0x40] sm:$0xff]
  %v1911 = vld [vmem:[%s5 + $0x48] sm:$0xff]
  %v1912 = vld [vmem:[%s5 + $0x50] sm:$0xff]
  %v1913 = vld [vmem:[%s5 + $0x58] sm:$0xff]
  %v1914 = vld [vmem:[%s5 + $0x60] sm:$0xff]
  %v1915 = vld [vmem:[%s5 + $0x68] sm:$0xff]
  %v1916 = vld [vmem:[%s5 + $0x70] sm:$0xff]
  %v1917 = vld [vmem:[%s5 + $0x78] sm:$0xff]
  %1918 = vmatprep.subr.mxu0 0.0
  %1919 = vmatpush1.msra.mxu0 %v1902
  %1920 = vmatprep.subr.mxu0 0.0
  %1921 = vmatpush1.msra.mxu0 %v1903
  %1922 = vmatprep.subr.mxu0 0.0
  %1923 = vmatpush1.msra.mxu0 %v1904
  %1924 = vmatprep.subr.mxu0 0.0
  %1925 = vmatpush1.msra.mxu0 %v1905
  %1926 = vmatprep.subr.mxu0 0.0
  %1927 = vmatpush1.msra.mxu0 %v1906
  %1928 = vmatprep.subr.mxu0 0.0
  %1929 = vmatpush1.msra.mxu0 %v1907
  %1930 = vmatprep.subr.mxu0 0.0
  %1931 = vmatpush1.msra.mxu0 %v1908
  %1932 = vmatprep.subr.mxu0 0.0
  %1933 = vmatpush1.msra.mxu0 %v1909
  %1934 = vmatprep.subr.mxu0 0.0
  %1935 = vmatpush1.msra.mxu0 %v1910
  %1936 = vmatprep.subr.mxu0 0.0
  %1937 = vmatpush1.msra.mxu0 %v1911
  %1938 = vmatprep.subr.mxu0 0.0
  %1939 = vmatpush1.msra.mxu0 %v1912
  %1940 = vmatprep.subr.mxu0 0.0
  %1941 = vmatpush1.msra.mxu0 %v1913
  %1942 = vmatprep.subr.mxu0 0.0
  %1943 = vmatpush1.msra.mxu0 %v1914
  %1944 = vmatprep.subr.mxu0 0.0
  %1945 = vmatpush1.msra.mxu0 %v1915
  %1946 = vmatprep.subr.mxu0 0.0
  %1947 = vmatpush1.msra.mxu0 %v1916
  %1948 = vmatprep.subr.mxu0 0.0
  %1949 = vmatpush1.msra.mxu0 %v1917
  %1950 = vmatprep.subr.mxu0 0.0
  %1951 = vmatpush1.msra.mxu0 0.0
  %1952 = vmatprep.subr.mxu0 0.0
  %1953 = vmatpush1.msra.mxu0 0.0
  %1954 = vmatprep.subr.mxu0 0.0
  %1955 = vmatpush1.msra.mxu0 0.0
  %1956 = vmatprep.subr.mxu0 0.0
  %1957 = vmatpush1.msra.mxu0 0.0
  %1958 = vmatprep.subr.mxu0 0.0
  %1959 = vmatpush1.msra.mxu0 0.0
  %1960 = vmatprep.subr.mxu0 0.0
  %1961 = vmatpush1.msra.mxu0 0.0
  %1962 = vmatprep.subr.mxu0 0.0
  %1963 = vmatpush1.msra.mxu0 0.0
  %1964 = vmatprep.subr.mxu0 0.0
  %1965 = vmatpush1.msra.mxu0 0.0
  %1966 = vmatprep.subr.mxu0 0.0
  %1967 = vmatpush1.msra.mxu0 0.0
  %1968 = vmatprep.subr.mxu0 0.0
  %1969 = vmatpush1.msra.mxu0 0.0
  %1970 = vmatprep.subr.mxu0 0.0
  %1971 = vmatpush1.msra.mxu0 0.0
  %1972 = vmatprep.subr.mxu0 0.0
  %1973 = vmatpush1.msra.mxu0 0.0
  %1974 = vmatprep.subr.mxu0 0.0
  %1975 = vmatpush1.msra.mxu0 0.0
  %1976 = vmatprep.subr.mxu0 0.0
  %1977 = vmatpush1.msra.mxu0 0.0
  %1978 = vmatprep.subr.mxu0 0.0
  %1979 = vmatpush1.msra.mxu0 0.0
  %1980 = vmatprep.subr.mxu0 0.0
  %1981 = vmatpush1.msra.mxu0 0.0
  %1982 = vmatprep.mubr.f32.mxu0 0.0
  %1983 = vmatmul.mubr.f32.gmra.mrb[0].mxu0 %v1898
  %v1984 = vpop.f32.mrb[0].mxu0
  %v1985 = vadd.f32 0.0, %v1984
  %v1986 = vpop.f32.mrb[0].mxu0
  %1987 = vmatprep.mubr.f32.mxu0 0.0
  %1988 = vmatmul.mubr.f32.gmra.mrb[0].mxu0 %v1899
  %v1989 = vpop.f32.mrb[0].mxu0
  %v1990 = vadd.f32 0.0, %v1989
  %v1991 = vpop.f32.mrb[0].mxu0
  %1992 = vmatprep.mubr.f32.mxu0 0.0
  %1993 = vmatmul.mubr.f32.gmra.mrb[0].mxu0 %v1900
  %v1994 = vpop.f32.mrb[0].mxu0
  %v1995 = vadd.f32 0.0, %v1994
  %v1996 = vpop.f32.mrb[0].mxu0
  %1997 = vmatprep.mubr.f32.mxu0 0.0
  %1998 = vmatmul.mubr.f32.gmra.mrb[0].mxu0 %v1901
  %v1999 = vpop.f32.mrb[0].mxu0
  %v2000 = vadd.f32 0.0, %v1999
  %v2001 = vpop.f32.mrb[0].mxu0
  %2002 = vdwg.mxu0
  %vm2003 = vcmask 15360
  %2004 = vst.msk [vmem:[%s7] sm:$0xff] %vm2003, %v1985
  %2005 = vst.msk [vmem:[%s7 + $0x8] sm:$0xff] %vm2003, %v1990
  %2006 = vst.msk [vmem:[%s7 + $0x10] sm:$0xff] %vm2003, %v1995
  %2007 = vst.msk [vmem:[%s7 + $0x18] sm:$0xff] %vm2003, %v2000
  // Predicated region
  $region30: #{_forward_batched.1} parent=0 // pred_check
    _
  $region31: #{_forward_batched.1} parent=0 // pred_check_branch
    %2009 = sbr.rel (0) target = $region33
  $region32: #{_forward_batched.1} parent=0 // pred_region
    _
  $region33: #{_forward_batched.1} parent=0 // pred_fallthru
    _
  // Predicated region
  $region34: #{_forward_batched.1} parent=0 // pred_check
    _
  $region35: #{_forward_batched.1} parent=0 // pred_check_branch
    %2011 = sbr.rel (0) target = $region37
  $region36: #{_forward_batched.1} parent=0 // pred_region
    _
  $region37: #{_forward_batched.1} parent=0 // pred_fallthru
    _
  // Predicated region
  $region38: #{_forward_batched.1} parent=0 // pred_check
    _
  $region39: #{_forward_batched.1} parent=0 // pred_check_branch
    %2013 = sbr.rel (0) target = $region41
  $region40: #{_forward_batched.1} parent=0 // pred_region
    _
  $region41: #{_forward_batched.1} parent=0 // pred_fallthru
    _
  // Predicated region
  $region42: #{_forward_batched.1} parent=0 // pred_check
    _
  $region43: #{_forward_batched.1} parent=0 // pred_check_branch
    %2015 = sbr.rel (0) target = $region45
  $region44: #{_forward_batched.1} parent=0 // pred_region
    _
  $region45: #{_forward_batched.1} parent=0 // pred_fallthru
    _

</llo_original>
